<compile_context>
chip_gen: v6e
topology: v6e:2x2x1
jax: 0.10.0
libtpu: 0.0.40
codegen_flags: <defaults>
</compile_context>

<pallas_src>
import math

import numpy as np
import jax
import jax.numpy as jnp
from jax import lax
from jax.experimental import pallas as pl
from jax.experimental.pallas import tpu as pltpu


# ---------------- config (small, consistent with the module) ----------------
B = 2          # batch
T = 8          # sequence length (== block_size)
C = 32         # n_embd
H = 4          # n_head
D = C // H     # head dim
LN_EPS = 1e-5


def _gelu_exact(x):
    # PyTorch nn.GELU() default = exact erf formulation
    return 0.5 * x * (1.0 + lax.erf(x / jnp.sqrt(2.0).astype(x.dtype)))


def decoder_kernel(x_ref, mask_ref,
                   ln1_g_ref, ln1_b_ref,
                   wqkv_ref, bqkv_ref,
                   wproj_ref, bproj_ref,
                   ln2_g_ref, ln2_b_ref,
                   wfc_ref, bfc_ref,
                   wfc2_ref, bfc2_ref,
                   o_ref):
    # x is the whole batch, flattened to (B*T, C)
    x = x_ref[...]                                   # (BT, C) f32

    # ---------------- LayerNorm 1 ----------------
    mu = jnp.mean(x, axis=-1, keepdims=True)
    var = jnp.mean((x - mu) ** 2, axis=-1, keepdims=True)
    xn = (x - mu) * lax.rsqrt(var + LN_EPS)
    xn = xn * ln1_g_ref[...] + ln1_b_ref[...]        # broadcast (1, C)

    # ---------------- QKV projection (one matmul over all B*T rows) ----------------
    # 1/sqrt(D) is already folded into the Q columns of wqkv/bqkv by the wrapper.
    qkv = jnp.dot(xn, wqkv_ref[...], preferred_element_type=jnp.float32) + bqkv_ref[...]

    # ---------------- head-batched causal attention ----------------
    # Stack heads onto a leading batch axis: (H, BT, D).
    q3 = jnp.stack([qkv[:, 0 * C + h * D: 0 * C + (h + 1) * D] for h in range(H)], axis=0)
    k3 = jnp.stack([qkv[:, 1 * C + h * D: 1 * C + (h + 1) * D] for h in range(H)], axis=0)
    v3 = jnp.stack([qkv[:, 2 * C + h * D: 2 * C + (h + 1) * D] for h in range(H)], axis=0)

    # Scores for all heads at once; transpose of K is absorbed into the dot_general.
    s = jnp.einsum('hid,hjd->hij', q3, k3,
                   preferred_element_type=jnp.float32)          # (H, BT, BT)
    # Additive mask (0 where attendable, -1e30 otherwise) is block-diagonal over
    # batches and causal within each batch, so flattening B into the row axis is safe.
    s = s + mask_ref[...]                                        # broadcast (BT, BT)
    p = jax.nn.softmax(s, axis=-1)                               # one softmax, full vregs
    y3 = jnp.einsum('hij,hjd->hid', p, v3,
                    preferred_element_type=jnp.float32)          # (H, BT, D)

    # back to (BT, C) with heads on the lane axis
    y = jnp.concatenate([y3[h] for h in range(H)], axis=-1)      # (BT, C)

    # attention output projection + residual 1
    attn_out = jnp.dot(y, wproj_ref[...], preferred_element_type=jnp.float32) + bproj_ref[...]
    x1 = x + attn_out

    # ---------------- LayerNorm 2 ----------------
    mu2 = jnp.mean(x1, axis=-1, keepdims=True)
    var2 = jnp.mean((x1 - mu2) ** 2, axis=-1, keepdims=True)
    xn2 = (x1 - mu2) * lax.rsqrt(var2 + LN_EPS)
    xn2 = xn2 * ln2_g_ref[...] + ln2_b_ref[...]

    # ---------------- MLP (Linear -> GELU -> Linear) ----------------
    h1 = jnp.dot(xn2, wfc_ref[...], preferred_element_type=jnp.float32) + bfc_ref[...]
    h1 = _gelu_exact(h1)
    mlp_out = jnp.dot(h1, wfc2_ref[...], preferred_element_type=jnp.float32) + bfc2_ref[...]

    # residual 2
    o_ref[...] = x1 + mlp_out


def _full_spec(shape):
    nd = len(shape)
    return pl.BlockSpec(shape, lambda i, _nd=nd: (0,) * _nd)


def decoder_forward(x, params):
    """x: [B, T, C] float32; params: dict of pre-transposed weights."""
    Bsz, Tlen, Cdim = x.shape
    BT = Bsz * Tlen
    xr = x.reshape(BT, Cdim)                      # free metadata reshape in the wrapper

    # fold 1/sqrt(D) into the Q columns of the QKV projection
    scale = 1.0 / math.sqrt(Cdim // H)
    col_scale = jnp.concatenate([
        jnp.full((Cdim,), scale, jnp.float32),
        jnp.ones((2 * Cdim,), jnp.float32)])
    w_qkv = params["w_qkv"] * col_scale[None, :]
    b_qkv = params["b_qkv"] * col_scale[None, :]

    # block-diagonal causal additive mask over the flattened (B*T) row axis
    idx = np.arange(BT)
    same_b = (idx[:, None] // Tlen) == (idx[None, :] // Tlen)
    causal = (idx[:, None] % Tlen) >= (idx[None, :] % Tlen)
    mask = jnp.asarray(np.where(same_b & causal, 0.0, -1e30), dtype=jnp.float32)

    weight_args = (
        mask,
        params["ln1_g"], params["ln1_b"],
        w_qkv, b_qkv,
        params["w_proj"], params["b_proj"],
        params["ln2_g"], params["ln2_b"],
        params["w_fc"], params["b_fc"],
        params["w_fc2"], params["b_fc2"],
    )

    in_specs = [_full_spec((BT, Cdim))] + [_full_spec(w.shape) for w in weight_args]

    out = pl.pallas_call(
        decoder_kernel,
        out_shape=jax.ShapeDtypeStruct((BT, Cdim), jnp.float32),
        grid_spec=pltpu.PrefetchScalarGridSpec(
            num_scalar_prefetch=0,
            grid=(1,),                            # single step: whole problem fits in VMEM
            in_specs=in_specs,
            out_specs=_full_spec((BT, Cdim)),
        ),
        compiler_params=pltpu.CompilerParams(
            dimension_semantics=("arbitrary",)),
    )(xr, *weight_args)
    return out.reshape(Bsz, Tlen, Cdim)


# ---------------- plain-JAX reference (for a correctness sanity check) ----------------
def decoder_reference(x, p):
    def ln(z, g, b):
        mu = jnp.mean(z, axis=-1, keepdims=True)
        var = jnp.mean((z - mu) ** 2, axis=-1, keepdims=True)
        return (z - mu) * lax.rsqrt(var + LN_EPS) * g + b

    xn = ln(x, p["ln1_g"], p["ln1_b"])
    qkv = xn @ p["w_qkv"] + p["b_qkv"]
    q, k, v = jnp.split(qkv, 3, axis=-1)
    q = q.reshape(B, T, H, D).transpose(0, 2, 1, 3)
    k = k.reshape(B, T, H, D).transpose(0, 2, 1, 3)
    v = v.reshape(B, T, H, D).transpose(0, 2, 1, 3)
    att = (q @ k.transpose(0, 1, 3, 2)) / math.sqrt(D)
    mask = jnp.tril(jnp.ones((T, T), bool))
    att = jnp.where(mask, att, -jnp.inf)
    att = jax.nn.softmax(att, axis=-1)
    y = (att @ v).transpose(0, 2, 1, 3).reshape(B, T, C)
    x1 = x + (y @ p["w_proj"] + p["b_proj"])
    xn2 = ln(x1, p["ln2_g"], p["ln2_b"])
    h1 = _gelu_exact(xn2 @ p["w_fc"] + p["b_fc"])
    return x1 + (h1 @ p["w_fc2"] + p["b_fc2"])


def init_params(key):
    ks = jax.random.split(key, 8)
    s = 0.02
    p = {
        "ln1_g": jnp.ones((1, C), jnp.float32),
        "ln1_b": jnp.zeros((1, C), jnp.float32),
        "w_qkv": s * jax.random.normal(ks[0], (C, 3 * C), jnp.float32),   # pre-transposed [in,out]
        "b_qkv": s * jax.random.normal(ks[1], (1, 3 * C), jnp.float32),
        "w_proj": s * jax.random.normal(ks[2], (C, C), jnp.float32),
        "b_proj": s * jax.random.normal(ks[3], (1, C), jnp.float32),
        "ln2_g": jnp.ones((1, C), jnp.float32),
        "ln2_b": jnp.zeros((1, C), jnp.float32),
        "w_fc": s * jax.random.normal(ks[4], (C, 4 * C), jnp.float32),
        "b_fc": s * jax.random.normal(ks[5], (1, 4 * C), jnp.float32),
        "w_fc2": s * jax.random.normal(ks[6], (4 * C, C), jnp.float32),
        "b_fc2": s * jax.random.normal(ks[7], (1, C), jnp.float32),
    }
    return p


if __name__ == "__main__":
    key = jax.random.PRNGKey(0)
    k_x, k_p = jax.random.split(key)
    x = jax.random.normal(k_x, (B, T, C), jnp.float32)
    params = init_params(k_p)

    out = decoder_forward(x, params)
    out = jax.block_until_ready(out)

    ref = decoder_reference(x, params)
    assert out.shape == (B, T, C)
    assert jnp.allclose(out, ref, atol=1e-4, rtol=1e-4), "mismatch vs reference"

    print("KERNEL_OK")
</pallas_src>

<mosaic_0001>
module attributes {stable_mosaic.version = 11 : i64} {
  func.func @decoder_kernel(%arg0: i32, %arg1: memref<16x32xf32, #tpu.memory_space<vmem>>, %arg2: memref<16x16xf32, #tpu.memory_space<vmem>>, %arg3: memref<1x32xf32, #tpu.memory_space<vmem>>, %arg4: memref<1x32xf32, #tpu.memory_space<vmem>>, %arg5: memref<32x96xf32, #tpu.memory_space<vmem>>, %arg6: memref<1x96xf32, #tpu.memory_space<vmem>>, %arg7: memref<32x32xf32, #tpu.memory_space<vmem>>, %arg8: memref<1x32xf32, #tpu.memory_space<vmem>>, %arg9: memref<1x32xf32, #tpu.memory_space<vmem>>, %arg10: memref<1x32xf32, #tpu.memory_space<vmem>>, %arg11: memref<32x128xf32, #tpu.memory_space<vmem>>, %arg12: memref<1x128xf32, #tpu.memory_space<vmem>>, %arg13: memref<128x32xf32, #tpu.memory_space<vmem>>, %arg14: memref<1x32xf32, #tpu.memory_space<vmem>>, %arg15: memref<16x32xf32, #tpu.memory_space<vmem>>) attributes {dimension_semantics = [#tpu.dimension_semantics<arbitrary>], iteration_bounds = array<i64: 1>, scalar_prefetch = 0 : i64, scratch_operands = 0 : i64, tpu.core_type = #tpu.core_type<tc>, window_params = [{pipeline_mode = #tpu.pipeline_mode<synchronous>, transform_indices = @transform_0, window_bounds = array<i64: 16, 32>}, {pipeline_mode = #tpu.pipeline_mode<synchronous>, transform_indices = @transform_1, window_bounds = array<i64: 16, 16>}, {pipeline_mode = #tpu.pipeline_mode<synchronous>, transform_indices = @transform_2, window_bounds = array<i64: 1, 32>}, {pipeline_mode = #tpu.pipeline_mode<synchronous>, transform_indices = @transform_3, window_bounds = array<i64: 1, 32>}, {pipeline_mode = #tpu.pipeline_mode<synchronous>, transform_indices = @transform_4, window_bounds = array<i64: 32, 96>}, {pipeline_mode = #tpu.pipeline_mode<synchronous>, transform_indices = @transform_5, window_bounds = array<i64: 1, 96>}, {pipeline_mode = #tpu.pipeline_mode<synchronous>, transform_indices = @transform_6, window_bounds = array<i64: 32, 32>}, {pipeline_mode = #tpu.pipeline_mode<synchronous>, transform_indices = @transform_7, window_bounds = array<i64: 1, 32>}, {pipeline_mode = #tpu.pipeline_mode<synchronous>, transform_indices = @transform_8, window_bounds = array<i64: 1, 32>}, {pipeline_mode = #tpu.pipeline_mode<synchronous>, transform_indices = @transform_9, window_bounds = array<i64: 1, 32>}, {pipeline_mode = #tpu.pipeline_mode<synchronous>, transform_indices = @transform_10, window_bounds = array<i64: 32, 128>}, {pipeline_mode = #tpu.pipeline_mode<synchronous>, transform_indices = @transform_11, window_bounds = array<i64: 1, 128>}, {pipeline_mode = #tpu.pipeline_mode<synchronous>, transform_indices = @transform_12, window_bounds = array<i64: 128, 32>}, {pipeline_mode = #tpu.pipeline_mode<synchronous>, transform_indices = @transform_13, window_bounds = array<i64: 1, 32>}, {pipeline_mode = #tpu.pipeline_mode<synchronous>, transform_indices = @transform_14, window_bounds = array<i64: 16, 32>}]} {
    %c0 = arith.constant 0 : index
    %c0_0 = arith.constant 0 : index
    %0 = vector.load %arg1[%c0, %c0_0] : memref<16x32xf32, #tpu.memory_space<vmem>>, vector<16x32xf32>
    %cst = arith.constant dense<0.000000e+00> : vector<16xf32>
    %1 = vector.multi_reduction <add>, %0, %cst [1] : vector<16x32xf32> to vector<16xf32>
    %2 = vector.shape_cast %1 : vector<16xf32> to vector<16x1xf32>
    %cst_1 = arith.constant 3.200000e+01 : f32
    %3 = vector.broadcast %cst_1 : f32 to vector<16x1xf32>
    %4 = arith.divf %2, %3 : vector<16x1xf32>
    %5 = vector.broadcast %4 : vector<16x1xf32> to vector<16x32xf32>
    %6 = arith.subf %0, %5 : vector<16x32xf32>
    %7 = arith.mulf %6, %6 : vector<16x32xf32>
    %cst_2 = arith.constant dense<0.000000e+00> : vector<16xf32>
    %8 = vector.multi_reduction <add>, %7, %cst_2 [1] : vector<16x32xf32> to vector<16xf32>
    %9 = vector.shape_cast %8 : vector<16xf32> to vector<16x1xf32>
    %cst_3 = arith.constant 3.200000e+01 : f32
    %10 = vector.broadcast %cst_3 : f32 to vector<16x1xf32>
    %11 = arith.divf %9, %10 : vector<16x1xf32>
    %12 = vector.broadcast %4 : vector<16x1xf32> to vector<16x32xf32>
    %13 = arith.subf %0, %12 : vector<16x32xf32>
    %cst_4 = arith.constant 9.99999974E-6 : f32
    %14 = vector.broadcast %cst_4 : f32 to vector<16x1xf32>
    %15 = arith.addf %11, %14 : vector<16x1xf32>
    %16 = math.rsqrt %15 : vector<16x1xf32>
    %17 = vector.broadcast %16 : vector<16x1xf32> to vector<16x32xf32>
    %18 = arith.mulf %13, %17 : vector<16x32xf32>
    %c0_5 = arith.constant 0 : index
    %c0_6 = arith.constant 0 : index
    %19 = vector.load %arg3[%c0_5, %c0_6] : memref<1x32xf32, #tpu.memory_space<vmem>>, vector<1x32xf32>
    %20 = vector.broadcast %19 : vector<1x32xf32> to vector<16x32xf32>
    %21 = arith.mulf %18, %20 : vector<16x32xf32>
    %c0_7 = arith.constant 0 : index
    %c0_8 = arith.constant 0 : index
    %22 = vector.load %arg4[%c0_7, %c0_8] : memref<1x32xf32, #tpu.memory_space<vmem>>, vector<1x32xf32>
    %23 = vector.broadcast %22 : vector<1x32xf32> to vector<16x32xf32>
    %24 = arith.addf %21, %23 : vector<16x32xf32>
    %c0_9 = arith.constant 0 : index
    %c0_10 = arith.constant 0 : index
    %25 = vector.load %arg5[%c0_9, %c0_10] : memref<32x96xf32, #tpu.memory_space<vmem>>, vector<32x96xf32>
    %cst_11 = arith.constant dense<0.000000e+00> : vector<16x96xf32>
    %26 = tpu.matmul %24, %25, %cst_11 {dimension_numbers = #tpu.dot_dimension_numbers<[1], [0], [0], [1], [0, 0, 1, 1], [], []>} : vector<16x32xf32>, vector<32x96xf32>, vector<16x96xf32> -> vector<16x96xf32>
    %c0_12 = arith.constant 0 : index
    %c0_13 = arith.constant 0 : index
    %27 = vector.load %arg6[%c0_12, %c0_13] : memref<1x96xf32, #tpu.memory_space<vmem>>, vector<1x96xf32>
    %28 = vector.broadcast %27 : vector<1x96xf32> to vector<16x96xf32>
    %29 = arith.addf %26, %28 : vector<16x96xf32>
    %30 = vector.extract_strided_slice %29 {offsets = [0, 0], sizes = [16, 8], strides = [1, 1]} : vector<16x96xf32> to vector<16x8xf32>
    %31 = vector.extract_strided_slice %29 {offsets = [0, 8], sizes = [16, 8], strides = [1, 1]} : vector<16x96xf32> to vector<16x8xf32>
    %32 = vector.extract_strided_slice %29 {offsets = [0, 16], sizes = [16, 8], strides = [1, 1]} : vector<16x96xf32> to vector<16x8xf32>
    %33 = vector.extract_strided_slice %29 {offsets = [0, 24], sizes = [16, 8], strides = [1, 1]} : vector<16x96xf32> to vector<16x8xf32>
    %34 = vector.shape_cast %30 : vector<16x8xf32> to vector<1x16x8xf32>
    %35 = vector.shape_cast %31 : vector<16x8xf32> to vector<1x16x8xf32>
    %36 = vector.shape_cast %32 : vector<16x8xf32> to vector<1x16x8xf32>
    %37 = vector.shape_cast %33 : vector<16x8xf32> to vector<1x16x8xf32>
    %38 = tpu.concatenate %34, %35, %36, %37 in 0 : vector<1x16x8xf32>, vector<1x16x8xf32>, vector<1x16x8xf32>, vector<1x16x8xf32> -> vector<4x16x8xf32>
    %39 = vector.extract_strided_slice %29 {offsets = [0, 32], sizes = [16, 8], strides = [1, 1]} : vector<16x96xf32> to vector<16x8xf32>
    %40 = vector.extract_strided_slice %29 {offsets = [0, 40], sizes = [16, 8], strides = [1, 1]} : vector<16x96xf32> to vector<16x8xf32>
    %41 = vector.extract_strided_slice %29 {offsets = [0, 48], sizes = [16, 8], strides = [1, 1]} : vector<16x96xf32> to vector<16x8xf32>
    %42 = vector.extract_strided_slice %29 {offsets = [0, 56], sizes = [16, 8], strides = [1, 1]} : vector<16x96xf32> to vector<16x8xf32>
    %43 = vector.shape_cast %39 : vector<16x8xf32> to vector<1x16x8xf32>
    %44 = vector.shape_cast %40 : vector<16x8xf32> to vector<1x16x8xf32>
    %45 = vector.shape_cast %41 : vector<16x8xf32> to vector<1x16x8xf32>
    %46 = vector.shape_cast %42 : vector<16x8xf32> to vector<1x16x8xf32>
    %47 = tpu.concatenate %43, %44, %45, %46 in 0 : vector<1x16x8xf32>, vector<1x16x8xf32>, vector<1x16x8xf32>, vector<1x16x8xf32> -> vector<4x16x8xf32>
    %48 = vector.extract_strided_slice %29 {offsets = [0, 64], sizes = [16, 8], strides = [1, 1]} : vector<16x96xf32> to vector<16x8xf32>
    %49 = vector.extract_strided_slice %29 {offsets = [0, 72], sizes = [16, 8], strides = [1, 1]} : vector<16x96xf32> to vector<16x8xf32>
    %50 = vector.extract_strided_slice %29 {offsets = [0, 80], sizes = [16, 8], strides = [1, 1]} : vector<16x96xf32> to vector<16x8xf32>
    %51 = vector.extract_strided_slice %29 {offsets = [0, 88], sizes = [16, 8], strides = [1, 1]} : vector<16x96xf32> to vector<16x8xf32>
    %52 = vector.shape_cast %48 : vector<16x8xf32> to vector<1x16x8xf32>
    %53 = vector.shape_cast %49 : vector<16x8xf32> to vector<1x16x8xf32>
    %54 = vector.shape_cast %50 : vector<16x8xf32> to vector<1x16x8xf32>
    %55 = vector.shape_cast %51 : vector<16x8xf32> to vector<1x16x8xf32>
    %56 = tpu.concatenate %52, %53, %54, %55 in 0 : vector<1x16x8xf32>, vector<1x16x8xf32>, vector<1x16x8xf32>, vector<1x16x8xf32> -> vector<4x16x8xf32>
    "tpu.trace_start"() <{level = 10 : i32, message = "hid,hjd->hij"}> : () -> ()
    %cst_14 = arith.constant dense<0.000000e+00> : vector<4x16x16xf32>
    %57 = tpu.matmul %38, %47, %cst_14 {dimension_numbers = #tpu.dot_dimension_numbers<[2], [2], [1], [1], [0, 0, 0, 1, 1, 1], [0], [0]>} : vector<4x16x8xf32>, vector<4x16x8xf32>, vector<4x16x16xf32> -> vector<4x16x16xf32>
    "tpu.trace_stop"() : () -> ()
    %c0_15 = arith.constant 0 : index
    %c0_16 = arith.constant 0 : index
    %58 = vector.load %arg2[%c0_15, %c0_16] : memref<16x16xf32, #tpu.memory_space<vmem>>, vector<16x16xf32>
    %59 = vector.shape_cast %58 : vector<16x16xf32> to vector<1x16x16xf32>
    %60 = vector.broadcast %59 : vector<1x16x16xf32> to vector<4x16x16xf32>
    %61 = arith.addf %57, %60 : vector<4x16x16xf32>
    %cst_17 = arith.constant dense<0xFF800000> : vector<4x16xf32>
    %62 = vector.multi_reduction <maximumf>, %61, %cst_17 [2] : vector<4x16x16xf32> to vector<4x16xf32>
    %cst_18 = arith.constant 0xFF800000 : f32
    %63 = vector.broadcast %cst_18 : f32 to vector<4x16xf32>
    %64 = arith.maximumf %63, %62 : vector<4x16xf32>
    %65 = vector.shape_cast %64 : vector<4x16xf32> to vector<4x16x1xf32>
    %66 = vector.broadcast %65 : vector<4x16x1xf32> to vector<4x16x16xf32>
    %67 = arith.subf %61, %66 : vector<4x16x16xf32>
    %68 = math.exp %67 : vector<4x16x16xf32>
    %cst_19 = arith.constant dense<0.000000e+00> : vector<4x16xf32>
    %69 = vector.multi_reduction <add>, %68, %cst_19 [2] : vector<4x16x16xf32> to vector<4x16xf32>
    %70 = vector.shape_cast %69 : vector<4x16xf32> to vector<4x16x1xf32>
    %71 = vector.broadcast %70 : vector<4x16x1xf32> to vector<4x16x16xf32>
    %72 = arith.divf %68, %71 : vector<4x16x16xf32>
    "tpu.trace_start"() <{level = 10 : i32, message = "hij,hjd->hid"}> : () -> ()
    %cst_20 = arith.constant dense<0.000000e+00> : vector<4x16x8xf32>
    %73 = tpu.matmul %72, %56, %cst_20 {dimension_numbers = #tpu.dot_dimension_numbers<[2], [1], [1], [2], [0, 0, 0, 1, 1, 2], [0], [0]>} : vector<4x16x16xf32>, vector<4x16x8xf32>, vector<4x16x8xf32> -> vector<4x16x8xf32>
    "tpu.trace_stop"() : () -> ()
    %74 = vector.extract_strided_slice %73 {offsets = [0, 0, 0], sizes = [1, 16, 8], strides = [1, 1, 1]} : vector<4x16x8xf32> to vector<1x16x8xf32>
    %75 = vector.shape_cast %74 : vector<1x16x8xf32> to vector<16x8xf32>
    %76 = vector.extract_strided_slice %73 {offsets = [1, 0, 0], sizes = [1, 16, 8], strides = [1, 1, 1]} : vector<4x16x8xf32> to vector<1x16x8xf32>
    %77 = vector.shape_cast %76 : vector<1x16x8xf32> to vector<16x8xf32>
    %78 = vector.extract_strided_slice %73 {offsets = [2, 0, 0], sizes = [1, 16, 8], strides = [1, 1, 1]} : vector<4x16x8xf32> to vector<1x16x8xf32>
    %79 = vector.shape_cast %78 : vector<1x16x8xf32> to vector<16x8xf32>
    %80 = vector.extract_strided_slice %73 {offsets = [3, 0, 0], sizes = [1, 16, 8], strides = [1, 1, 1]} : vector<4x16x8xf32> to vector<1x16x8xf32>
    %81 = vector.shape_cast %80 : vector<1x16x8xf32> to vector<16x8xf32>
    %82 = tpu.concatenate %75, %77, %79, %81 in 1 : vector<16x8xf32>, vector<16x8xf32>, vector<16x8xf32>, vector<16x8xf32> -> vector<16x32xf32>
    %c0_21 = arith.constant 0 : index
    %c0_22 = arith.constant 0 : index
    %83 = vector.load %arg7[%c0_21, %c0_22] : memref<32x32xf32, #tpu.memory_space<vmem>>, vector<32x32xf32>
    %cst_23 = arith.constant dense<0.000000e+00> : vector<16x32xf32>
    %84 = tpu.matmul %82, %83, %cst_23 {dimension_numbers = #tpu.dot_dimension_numbers<[1], [0], [0], [1], [0, 0, 1, 1], [], []>} : vector<16x32xf32>, vector<32x32xf32>, vector<16x32xf32> -> vector<16x32xf32>
    %c0_24 = arith.constant 0 : index
    %c0_25 = arith.constant 0 : index
    %85 = vector.load %arg8[%c0_24, %c0_25] : memref<1x32xf32, #tpu.memory_space<vmem>>, vector<1x32xf32>
    %86 = vector.broadcast %85 : vector<1x32xf32> to vector<16x32xf32>
    %87 = arith.addf %84, %86 : vector<16x32xf32>
    %88 = arith.addf %0, %87 : vector<16x32xf32>
    %cst_26 = arith.constant dense<0.000000e+00> : vector<16xf32>
    %89 = vector.multi_reduction <add>, %88, %cst_26 [1] : vector<16x32xf32> to vector<16xf32>
    %90 = vector.shape_cast %89 : vector<16xf32> to vector<16x1xf32>
    %cst_27 = arith.constant 3.200000e+01 : f32
    %91 = vector.broadcast %cst_27 : f32 to vector<16x1xf32>
    %92 = arith.divf %90, %91 : vector<16x1xf32>
    %93 = vector.broadcast %92 : vector<16x1xf32> to vector<16x32xf32>
    %94 = arith.subf %88, %93 : vector<16x32xf32>
    %95 = arith.mulf %94, %94 : vector<16x32xf32>
    %cst_28 = arith.constant dense<0.000000e+00> : vector<16xf32>
    %96 = vector.multi_reduction <add>, %95, %cst_28 [1] : vector<16x32xf32> to vector<16xf32>
    %97 = vector.shape_cast %96 : vector<16xf32> to vector<16x1xf32>
    %cst_29 = arith.constant 3.200000e+01 : f32
    %98 = vector.broadcast %cst_29 : f32 to vector<16x1xf32>
    %99 = arith.divf %97, %98 : vector<16x1xf32>
    %100 = vector.broadcast %92 : vector<16x1xf32> to vector<16x32xf32>
    %101 = arith.subf %88, %100 : vector<16x32xf32>
    %cst_30 = arith.constant 9.99999974E-6 : f32
    %102 = vector.broadcast %cst_30 : f32 to vector<16x1xf32>
    %103 = arith.addf %99, %102 : vector<16x1xf32>
    %104 = math.rsqrt %103 : vector<16x1xf32>
    %105 = vector.broadcast %104 : vector<16x1xf32> to vector<16x32xf32>
    %106 = arith.mulf %101, %105 : vector<16x32xf32>
    %c0_31 = arith.constant 0 : index
    %c0_32 = arith.constant 0 : index
    %107 = vector.load %arg9[%c0_31, %c0_32] : memref<1x32xf32, #tpu.memory_space<vmem>>, vector<1x32xf32>
    %108 = vector.broadcast %107 : vector<1x32xf32> to vector<16x32xf32>
    %109 = arith.mulf %106, %108 : vector<16x32xf32>
    %c0_33 = arith.constant 0 : index
    %c0_34 = arith.constant 0 : index
    %110 = vector.load %arg10[%c0_33, %c0_34] : memref<1x32xf32, #tpu.memory_space<vmem>>, vector<1x32xf32>
    %111 = vector.broadcast %110 : vector<1x32xf32> to vector<16x32xf32>
    %112 = arith.addf %109, %111 : vector<16x32xf32>
    %c0_35 = arith.constant 0 : index
    %c0_36 = arith.constant 0 : index
    %113 = vector.load %arg11[%c0_35, %c0_36] : memref<32x128xf32, #tpu.memory_space<vmem>>, vector<32x128xf32>
    %cst_37 = arith.constant dense<0.000000e+00> : vector<16x128xf32>
    %114 = tpu.matmul %112, %113, %cst_37 {dimension_numbers = #tpu.dot_dimension_numbers<[1], [0], [0], [1], [0, 0, 1, 1], [], []>} : vector<16x32xf32>, vector<32x128xf32>, vector<16x128xf32> -> vector<16x128xf32>
    %c0_38 = arith.constant 0 : index
    %c0_39 = arith.constant 0 : index
    %115 = vector.load %arg12[%c0_38, %c0_39] : memref<1x128xf32, #tpu.memory_space<vmem>>, vector<1x128xf32>
    %116 = vector.broadcast %115 : vector<1x128xf32> to vector<16x128xf32>
    %117 = arith.addf %114, %116 : vector<16x128xf32>
    %cst_40 = arith.constant 5.000000e-01 : f32
    %118 = vector.broadcast %cst_40 : f32 to vector<16x128xf32>
    %119 = arith.mulf %118, %117 : vector<16x128xf32>
    %cst_41 = arith.constant 2.000000e+00 : f32
    %120 = math.sqrt %cst_41 : f32
    %121 = vector.broadcast %120 : f32 to vector<16x128xf32>
    %122 = arith.divf %117, %121 : vector<16x128xf32>
    %123 = math.erf %122 : vector<16x128xf32>
    %cst_42 = arith.constant 1.000000e+00 : f32
    %124 = vector.broadcast %cst_42 : f32 to vector<16x128xf32>
    %125 = arith.addf %124, %123 : vector<16x128xf32>
    %126 = arith.mulf %119, %125 : vector<16x128xf32>
    %c0_43 = arith.constant 0 : index
    %c0_44 = arith.constant 0 : index
    %127 = vector.load %arg13[%c0_43, %c0_44] : memref<128x32xf32, #tpu.memory_space<vmem>>, vector<128x32xf32>
    %cst_45 = arith.constant dense<0.000000e+00> : vector<16x32xf32>
    %128 = tpu.matmul %126, %127, %cst_45 {dimension_numbers = #tpu.dot_dimension_numbers<[1], [0], [0], [1], [0, 0, 1, 1], [], []>} : vector<16x128xf32>, vector<128x32xf32>, vector<16x32xf32> -> vector<16x32xf32>
    %c0_46 = arith.constant 0 : index
    %c0_47 = arith.constant 0 : index
    %129 = vector.load %arg14[%c0_46, %c0_47] : memref<1x32xf32, #tpu.memory_space<vmem>>, vector<1x32xf32>
    %130 = vector.broadcast %129 : vector<1x32xf32> to vector<16x32xf32>
    %131 = arith.addf %128, %130 : vector<16x32xf32>
    %132 = arith.addf %88, %131 : vector<16x32xf32>
    %c0_48 = arith.constant 0 : index
    %c0_49 = arith.constant 0 : index
    %133 = vector.load %arg15[%c0_48, %c0_49] : memref<16x32xf32, #tpu.memory_space<vmem>>, vector<16x32xf32>
    tpu.vector_store %arg15[%c0_48, %c0_49], %132 {strides = array<i32>} : memref<16x32xf32, #tpu.memory_space<vmem>>, vector<16x32xf32>,
    return
  }
  func.func @transform_0(%arg0: i32) -> (i32, i32) {
    %c0_i32 = arith.constant 0 : i32
    %c0_i32_0 = arith.constant 0 : i32
    %c0_i32_1 = arith.constant 0 : i32
    return %c0_i32, %c0_i32_0 : i32, i32
  }
  func.func @transform_1(%arg0: i32) -> (i32, i32) {
    %c0_i32 = arith.constant 0 : i32
    %c0_i32_0 = arith.constant 0 : i32
    %c0_i32_1 = arith.constant 0 : i32
    return %c0_i32, %c0_i32_0 : i32, i32
  }
  func.func @transform_2(%arg0: i32) -> (i32, i32) {
    %c0_i32 = arith.constant 0 : i32
    %c0_i32_0 = arith.constant 0 : i32
    %c0_i32_1 = arith.constant 0 : i32
    return %c0_i32, %c0_i32_0 : i32, i32
  }
  func.func @transform_3(%arg0: i32) -> (i32, i32) {
    %c0_i32 = arith.constant 0 : i32
    %c0_i32_0 = arith.constant 0 : i32
    %c0_i32_1 = arith.constant 0 : i32
    return %c0_i32, %c0_i32_0 : i32, i32
  }
  func.func @transform_4(%arg0: i32) -> (i32, i32) {
    %c0_i32 = arith.constant 0 : i32
    %c0_i32_0 = arith.constant 0 : i32
    %c0_i32_1 = arith.constant 0 : i32
    return %c0_i32, %c0_i32_0 : i32, i32
  }
  func.func @transform_5(%arg0: i32) -> (i32, i32) {
    %c0_i32 = arith.constant 0 : i32
    %c0_i32_0 = arith.constant 0 : i32
    %c0_i32_1 = arith.constant 0 : i32
    return %c0_i32, %c0_i32_0 : i32, i32
  }
  func.func @transform_6(%arg0: i32) -> (i32, i32) {
    %c0_i32 = arith.constant 0 : i32
    %c0_i32_0 = arith.constant 0 : i32
    %c0_i32_1 = arith.constant 0 : i32
    return %c0_i32, %c0_i32_0 : i32, i32
  }
  func.func @transform_7(%arg0: i32) -> (i32, i32) {
    %c0_i32 = arith.constant 0 : i32
    %c0_i32_0 = arith.constant 0 : i32
    %c0_i32_1 = arith.constant 0 : i32
    return %c0_i32, %c0_i32_0 : i32, i32
  }
  func.func @transform_8(%arg0: i32) -> (i32, i32) {
    %c0_i32 = arith.constant 0 : i32
    %c0_i32_0 = arith.constant 0 : i32
    %c0_i32_1 = arith.constant 0 : i32
    return %c0_i32, %c0_i32_0 : i32, i32
  }
  func.func @transform_9(%arg0: i32) -> (i32, i32) {
    %c0_i32 = arith.constant 0 : i32
    %c0_i32_0 = arith.constant 0 : i32
    %c0_i32_1 = arith.constant 0 : i32
    return %c0_i32, %c0_i32_0 : i32, i32
  }
  func.func @transform_10(%arg0: i32) -> (i32, i32) {
    %c0_i32 = arith.constant 0 : i32
    %c0_i32_0 = arith.constant 0 : i32
    %c0_i32_1 = arith.constant 0 : i32
    return %c0_i32, %c0_i32_0 : i32, i32
  }
  func.func @transform_11(%arg0: i32) -> (i32, i32) {
    %c0_i32 = arith.constant 0 : i32
    %c0_i32_0 = arith.constant 0 : i32
    %c0_i32_1 = arith.constant 0 : i32
    return %c0_i32, %c0_i32_0 : i32, i32
  }
  func.func @transform_12(%arg0: i32) -> (i32, i32) {
    %c0_i32 = arith.constant 0 : i32
    %c0_i32_0 = arith.constant 0 : i32
    %c0_i32_1 = arith.constant 0 : i32
    return %c0_i32, %c0_i32_0 : i32, i32
  }
  func.func @transform_13(%arg0: i32) -> (i32, i32) {
    %c0_i32 = arith.constant 0 : i32
    %c0_i32_0 = arith.constant 0 : i32
    %c0_i32_1 = arith.constant 0 : i32
    return %c0_i32, %c0_i32_0 : i32, i32
  }
  func.func @transform_14(%arg0: i32) -> (i32, i32) {
    %c0_i32 = arith.constant 0 : i32
    %c0_i32_0 = arith.constant 0 : i32
    %c0_i32_1 = arith.constant 0 : i32
    return %c0_i32, %c0_i32_0 : i32, i32
  }
}

</mosaic_0001>

<llo_original>
// kernel: tpu_custom_call.1
$region0: #{tpu_custom_call.1}
  #allocation0 [shape = 'u32[]', space=smem, size = 0x4, offset = 0x4, fixed_abs, tag = 'smem constant byte address 0x4 - core index']
  #allocation1 [shape = 'u32[144,128]{1,0:T(1,128)}', space=vmem, size = 0x12000, scoped, tag = 'internal scratch']
  %s0 = inlined_call_operand.vmem [shape: f32[16,32], index: 0, kind: input, shape index: {}]
  %s1 = inlined_call_operand.vmem [shape: f32[16,16], index: 1, kind: input, shape index: {}]
  %s2 = inlined_call_operand.vmem [shape: f32[1,32], index: 2, kind: input, shape index: {}]
  %s3 = inlined_call_operand.vmem [shape: f32[1,32], index: 3, kind: input, shape index: {}]
  %s4 = inlined_call_operand.vmem [shape: f32[32,96], index: 4, kind: input, shape index: {}]
  %s5 = inlined_call_operand.vmem [shape: f32[1,96], index: 5, kind: input, shape index: {}]
  %s6 = inlined_call_operand.vmem [shape: f32[32,32], index: 6, kind: input, shape index: {}]
  %s7 = inlined_call_operand.vmem [shape: f32[1,32], index: 7, kind: input, shape index: {}]
  %s8 = inlined_call_operand.vmem [shape: f32[1,32], index: 8, kind: input, shape index: {}]
  %s9 = inlined_call_operand.vmem [shape: f32[1,32], index: 9, kind: input, shape index: {}]
  %s10 = inlined_call_operand.vmem [shape: f32[32,128], index: 10, kind: input, shape index: {}]
  %s11 = inlined_call_operand.vmem [shape: f32[1,128], index: 11, kind: input, shape index: {}]
  %s12 = inlined_call_operand.vmem [shape: f32[128,32], index: 12, kind: input, shape index: {}]
  %s13 = inlined_call_operand.vmem [shape: f32[1,32], index: 13, kind: input, shape index: {}]
  %s14 = inlined_call_operand.hbm [shape: f32[16,32], index: 14, kind: output, shape index: {}]
  %s15 = sld [smem:[#allocation0]]
  $region66: #{tpu_custom_call.1} parent=0
    _
  %s17 = ssub.s32 1, %s15
  %s18 = scalar_select 0, %s17, %s15
  $region1: #{tpu_custom_call.1} parent=0
    #allocation2 [shape = 'u8[8192]{0}', space=vmem, size = 0x2000, scoped, tag = 'output window, operand 0, single buffered']
    #allocation3 [shape = 's32[1]{0}', space=sflag, size = 0x4, scoped, tag = 'scoped memory for tpu_custom_call.1']
    %19 = vsyncpa [#allocation3], 0
    // Predicated region
    $region2: #{tpu_custom_call.1} parent=1 // pred_check
      _
    $region3: #{tpu_custom_call.1} parent=1 // pred_check_branch
      %21 = sbr.rel (0) target = $region5
    $region4: #{tpu_custom_call.1} parent=1 // pred_region
      _
    $region5: #{tpu_custom_call.1} parent=1 // pred_fallthru
      _
    // Predicated region
    $region6: #{tpu_custom_call.1} parent=1 // pred_check
      _
    $region7: #{tpu_custom_call.1} parent=1 // pred_check_branch
      %23 = sbr.rel (0) target = $region9
    $region8: #{tpu_custom_call.1} parent=1 // pred_region
      _
    $region9: #{tpu_custom_call.1} parent=1 // pred_fallthru
      _
    // Predicated region
    $region10: #{tpu_custom_call.1} parent=1 // pred_check
      _
    $region11: #{tpu_custom_call.1} parent=1 // pred_check_branch
      %25 = sbr.rel (0) target = $region13
    $region12: #{tpu_custom_call.1} parent=1 // pred_region
      _
    $region13: #{tpu_custom_call.1} parent=1 // pred_fallthru
      _
    // Predicated region
    $region14: #{tpu_custom_call.1} parent=1 // pred_check
      _
    $region15: #{tpu_custom_call.1} parent=1 // pred_check_branch
      %27 = sbr.rel (0) target = $region17
    $region16: #{tpu_custom_call.1} parent=1 // pred_region
      _
    $region17: #{tpu_custom_call.1} parent=1 // pred_fallthru
      _
    // Predicated region
    $region18: #{tpu_custom_call.1} parent=1 // pred_check
      _
    $region19: #{tpu_custom_call.1} parent=1 // pred_check_branch
      %29 = sbr.rel (0) target = $region21
    $region20: #{tpu_custom_call.1} parent=1 // pred_region
      _
    $region21: #{tpu_custom_call.1} parent=1 // pred_fallthru
      _
    // Predicated region
    $region22: #{tpu_custom_call.1} parent=1 // pred_check
      _
    $region23: #{tpu_custom_call.1} parent=1 // pred_check_branch
      %31 = sbr.rel (0) target = $region25
    $region24: #{tpu_custom_call.1} parent=1 // pred_region
      _
    $region25: #{tpu_custom_call.1} parent=1 // pred_fallthru
      _
    // Predicated region
    $region26: #{tpu_custom_call.1} parent=1 // pred_check
      _
    $region27: #{tpu_custom_call.1} parent=1 // pred_check_branch
      %33 = sbr.rel (0) target = $region29
    $region28: #{tpu_custom_call.1} parent=1 // pred_region
      _
    $region29: #{tpu_custom_call.1} parent=1 // pred_fallthru
      _
    // Predicated region
    $region30: #{tpu_custom_call.1} parent=1 // pred_check
      _
    $region31: #{tpu_custom_call.1} parent=1 // pred_check_branch
      %35 = sbr.rel (0) target = $region33
    $region32: #{tpu_custom_call.1} parent=1 // pred_region
      _
    $region33: #{tpu_custom_call.1} parent=1 // pred_fallthru
      _
    // Predicated region
    $region34: #{tpu_custom_call.1} parent=1 // pred_check
      _
    $region35: #{tpu_custom_call.1} parent=1 // pred_check_branch
      %37 = sbr.rel (0) target = $region37
    $region36: #{tpu_custom_call.1} parent=1 // pred_region
      _
    $region37: #{tpu_custom_call.1} parent=1 // pred_fallthru
      _
    // Predicated region
    $region38: #{tpu_custom_call.1} parent=1 // pred_check
      _
    $region39: #{tpu_custom_call.1} parent=1 // pred_check_branch
      %39 = sbr.rel (0) target = $region41
    $region40: #{tpu_custom_call.1} parent=1 // pred_region
      _
    $region41: #{tpu_custom_call.1} parent=1 // pred_fallthru
      _
    // Predicated region
    $region42: #{tpu_custom_call.1} parent=1 // pred_check
      _
    $region43: #{tpu_custom_call.1} parent=1 // pred_check_branch
      %41 = sbr.rel (0) target = $region45
    $region44: #{tpu_custom_call.1} parent=1 // pred_region
      _
    $region45: #{tpu_custom_call.1} parent=1 // pred_fallthru
      _
    // Predicated region
    $region46: #{tpu_custom_call.1} parent=1 // pred_check
      _
    $region47: #{tpu_custom_call.1} parent=1 // pred_check_branch
      %43 = sbr.rel (0) target = $region49
    $region48: #{tpu_custom_call.1} parent=1 // pred_region
      _
    $region49: #{tpu_custom_call.1} parent=1 // pred_fallthru
      _
    // Predicated region
    $region50: #{tpu_custom_call.1} parent=1 // pred_check
      _
    $region51: #{tpu_custom_call.1} parent=1 // pred_check_branch
      %45 = sbr.rel (0) target = $region53
    $region52: #{tpu_custom_call.1} parent=1 // pred_region
      _
    $region53: #{tpu_custom_call.1} parent=1 // pred_fallthru
      _
    // Predicated region
    $region54: #{tpu_custom_call.1} parent=1 // pred_check
      _
    $region55: #{tpu_custom_call.1} parent=1 // pred_check_branch
      %47 = sbr.rel (0) target = $region57
    $region56: #{tpu_custom_call.1} parent=1 // pred_region
      _
    $region57: #{tpu_custom_call.1} parent=1 // pred_fallthru
      _
    %v48 = vld [vmem:[%s0] sm:$0xff]
    %v49 = vld [vmem:[%s0 + $0x8] sm:$0xff]
    %vm50 = vcmask 261120
    %v51 = vsel %vm50, %v48, 0.0
    %52 = vadd.xlane.f32.xlu0 %v51
    %v53 = vpop.xlane.xlu0 %52
    %v54 = vsel %vm50, %v49, 0.0
    %55 = vadd.xlane.f32.xlu0 %v54
    %v56 = vpop.xlane.xlu0 %55
    %v57 = vrcp.pop 32.0
    %v58 = vmul.f32 %v53, %v57
    %v59 = vmul.f32 %v56, %v57
    %v60 = vsub.f32 %v48, %v58
    %v61 = vsub.f32 %v49, %v59
    %v62 = vmul.f32 %v60, %v60
    %v63 = vmul.f32 %v61, %v61
    %v64 = vsel %vm50, %v62, 0.0
    %65 = vadd.xlane.f32.xlu0 %v64
    %v66 = vpop.xlane.xlu0 %65
    %v67 = vsel %vm50, %v63, 0.0
    %68 = vadd.xlane.f32.xlu0 %v67
    %v69 = vpop.xlane.xlu0 %68
    %v70 = vmul.f32 %v66, %v57
    %v71 = vmul.f32 %v69, %v57
    %v72 = vadd.f32 %v70, 1e-05
    %v73 = vadd.f32 %v71, 1e-05
    %v74 = vrsqrt.pop %v72
    %v75 = vrsqrt.pop %v73
    %v76 = vmul.f32 %v60, %v74
    %v77 = vmul.f32 %v61, %v75
    %v78 = vld [vmem:[%s2] sm:$0x1]
    %v80 = vlaneseq
    %v81 = vshrl.u32 %v80, 7
    %v82 = vsub.s32 0, %v81
    %v83 = vrot.slane %v78, %v82
    %v85 = vmul.f32 %v76, %v83
    %v86 = vmul.f32 %v77, %v83
    %v87 = vld [vmem:[%s3] sm:$0x1]
    %v89 = vlaneseq
    %v90 = vshrl.u32 %v89, 7
    %v91 = vsub.s32 0, %v90
    %v92 = vrot.slane %v87, %v91
    %v94 = vadd.f32 %v85, %v92
    %v95 = vadd.f32 %v86, %v92
    %v96 = vld [vmem:[%s4] sm:$0xff]
    %v97 = vld [vmem:[%s4 + $0x8] sm:$0xff]
    %v98 = vld [vmem:[%s4 + $0x10] sm:$0xff]
    %v99 = vld [vmem:[%s4 + $0x18] sm:$0xff]
    %v100 = vld [vmem:[%s5] sm:$0x1]
    %v102 = vlaneseq
    %v103 = vshrl.u32 %v102, 7
    %v104 = vsub.s32 0, %v103
    %v105 = vrot.slane %v100, %v104
    %v108 = vsel %vm50, %v94, 0
    %v111 = vsel %vm50, %v95, 0
    %113 = vmatprep.subr.mxu0 0.0
    %114 = vmatpush1.msra.mxu0 0.0
    %115 = vmatprep.subr.mxu0 0.0
    %116 = vmatpush1.msra.mxu0 0.0
    %117 = vmatprep.subr.mxu0 0.0
    %118 = vmatpush1.msra.mxu0 0.0
    %119 = vmatprep.subr.mxu0 0.0
    %120 = vmatpush1.msra.mxu0 0.0
    %121 = vmatprep.subr.mxu0 0.0
    %122 = vmatpush1.msra.mxu0 0.0
    %123 = vmatprep.subr.mxu0 0.0
    %124 = vmatpush1.msra.mxu0 0.0
    %125 = vmatprep.subr.mxu0 0.0
    %126 = vmatpush1.msra.mxu0 0.0
    %127 = vmatprep.subr.mxu0 0.0
    %128 = vmatpush1.msra.mxu0 0.0
    %129 = vmatprep.subr.mxu0 0.0
    %130 = vmatpush1.msra.mxu0 0.0
    %131 = vmatprep.subr.mxu0 0.0
    %132 = vmatpush1.msra.mxu0 0.0
    %133 = vmatprep.subr.mxu0 0.0
    %134 = vmatpush1.msra.mxu0 0.0
    %135 = vmatprep.subr.mxu0 0.0
    %136 = vmatpush1.msra.mxu0 0.0
    %137 = vmatprep.subr.mxu0 0.0
    %138 = vmatpush1.msra.mxu0 %v99
    %139 = vmatprep.subr.mxu0 0.0
    %140 = vmatpush1.msra.mxu0 %v98
    %141 = vmatprep.subr.mxu0 0.0
    %142 = vmatpush1.msra.mxu0 %v97
    %143 = vmatprep.subr.mxu0 0.0
    %144 = vmatpush1.msra.mxu0 %v96
    %145 = vmatprep.subr.mxu0 0.0
    %146 = vmatpush2.msra.mxu0 0.0
    %147 = vmatprep.subr.mxu0 0.0
    %148 = vmatpush2.msra.mxu0 0.0
    %149 = vmatprep.subr.mxu0 0.0
    %150 = vmatpush2.msra.mxu0 0.0
    %151 = vmatprep.subr.mxu0 0.0
    %152 = vmatpush2.msra.mxu0 0.0
    %153 = vmatprep.subr.mxu0 0.0
    %154 = vmatpush2.msra.mxu0 0.0
    %155 = vmatprep.subr.mxu0 0.0
    %156 = vmatpush2.msra.mxu0 0.0
    %157 = vmatprep.subr.mxu0 0.0
    %158 = vmatpush2.msra.mxu0 0.0
    %159 = vmatprep.subr.mxu0 0.0
    %160 = vmatpush2.msra.mxu0 0.0
    %161 = vmatprep.subr.mxu0 0.0
    %162 = vmatpush2.msra.mxu0 0.0
    %163 = vmatprep.subr.mxu0 0.0
    %164 = vmatpush2.msra.mxu0 0.0
    %165 = vmatprep.subr.mxu0 0.0
    %166 = vmatpush2.msra.mxu0 0.0
    %167 = vmatprep.subr.mxu0 0.0
    %168 = vmatpush2.msra.mxu0 0.0
    %169 = vmatprep.subr.mxu0 0.0
    %170 = vmatpush2.msra.mxu0 0.0
    %171 = vmatprep.subr.mxu0 0.0
    %172 = vmatpush2.msra.mxu0 0.0
    %173 = vmatprep.subr.mxu0 0.0
    %174 = vmatpush2.msra.mxu0 0.0
    %175 = vmatprep.subr.mxu0 0.0
    %176 = vmatpush2.msra.mxu0 0.0
    %177 = vmatprep.mubr.f32.mxu0 0.0
    %178 = vmatmul.mubr.f32.gmra.mxu0 %v108
    %v179 = vpop.f32.mrf.mxu0
    %v180 = vadd.f32 %v105, %v179
    %v181 = vpop.f32.mrf.mxu0
    %182 = vmatprep.mubr.f32.mxu0 0.0
    %183 = vmatmul.mubr.f32.gmra.mxu0 %v111
    %v184 = vpop.f32.mrf.mxu0
    %v185 = vadd.f32 %v105, %v184
    %v186 = vpop.f32.mrf.mxu0
    %187 = vdwg.mxu0
    %190 = vrot.lane.b32.xlu0 %v180, 120
    %v191 = vpop.permute.xlu0 %190
    %192 = vrot.lane.b32.xlu0 %v185, 120
    %v193 = vpop.permute.xlu0 %192
    %194 = vrot.lane.b32.xlu0 %v180, 112
    %v195 = vpop.permute.xlu0 %194
    %196 = vrot.lane.b32.xlu0 %v185, 112
    %v197 = vpop.permute.xlu0 %196
    %198 = vrot.lane.b32.xlu0 %v180, 104
    %v199 = vpop.permute.xlu0 %198
    %200 = vrot.lane.b32.xlu0 %v185, 104
    %v201 = vpop.permute.xlu0 %200
    %v202 = vld [vmem:[%s1] sm:$0xff]
    %v203 = vld [vmem:[%s1 + $0x8] sm:$0xff]
    %204 = vrot.lane.b32.xlu0 %v180, 96
    %v205 = vpop.permute.xlu0 %204
    %206 = vrot.lane.b32.xlu0 %v185, 96
    %v207 = vpop.permute.xlu0 %206
    %vm208 = vcmask 64512
    %v209 = vsel %vm208, %v180, 0
    %v211 = vsel %vm208, %v185, 0
    %v213 = vsel %vm208, %v205, 0
    %v215 = vsel %vm208, %v207, 0
    %217 = vmatprep.subr.mxu0 0.0
    %218 = vmatpush1.xpose.msra.mxu0 0.0
    %219 = vmatprep.subr.mxu0 0.0
    %220 = vmatpush1.xpose.msra.mxu0 0.0
    %221 = vmatprep.subr.mxu0 0.0
    %222 = vmatpush1.xpose.msra.mxu0 0.0
    %223 = vmatprep.subr.mxu0 0.0
    %224 = vmatpush1.xpose.msra.mxu0 0.0
    %225 = vmatprep.subr.mxu0 0.0
    %226 = vmatpush1.xpose.msra.mxu0 0.0
    %227 = vmatprep.subr.mxu0 0.0
    %228 = vmatpush1.xpose.msra.mxu0 0.0
    %229 = vmatprep.subr.mxu0 0.0
    %230 = vmatpush1.xpose.msra.mxu0 0.0
    %231 = vmatprep.subr.mxu0 0.0
    %232 = vmatpush1.xpose.msra.mxu0 0.0
    %233 = vmatprep.subr.mxu0 0.0
    %234 = vmatpush1.xpose.msra.mxu0 0.0
    %235 = vmatprep.subr.mxu0 0.0
    %236 = vmatpush1.xpose.msra.mxu0 0.0
    %237 = vmatprep.subr.mxu0 0.0
    %238 = vmatpush1.xpose.msra.mxu0 0.0
    %239 = vmatprep.subr.mxu0 0.0
    %240 = vmatpush1.xpose.msra.mxu0 0.0
    %241 = vmatprep.subr.mxu0 0.0
    %242 = vmatpush1.xpose.msra.mxu0 0.0
    %243 = vmatprep.subr.mxu0 0.0
    %244 = vmatpush1.xpose.msra.mxu0 0.0
    %245 = vmatprep.subr.mxu0 0.0
    %246 = vmatpush1.xpose.msra.mxu0 %v215
    %247 = vmatprep.subr.mxu0 0.0
    %248 = vmatpush1.xpose.msra.mxu0 %v213
    %249 = vmatprep.subr.mxu0 0.0
    %250 = vmatpush2.xpose.msra.mxu0 0.0
    %251 = vmatprep.subr.mxu0 0.0
    %252 = vmatpush2.xpose.msra.mxu0 0.0
    %253 = vmatprep.subr.mxu0 0.0
    %254 = vmatpush2.xpose.msra.mxu0 0.0
    %255 = vmatprep.subr.mxu0 0.0
    %256 = vmatpush2.xpose.msra.mxu0 0.0
    %257 = vmatprep.subr.mxu0 0.0
    %258 = vmatpush2.xpose.msra.mxu0 0.0
    %259 = vmatprep.subr.mxu0 0.0
    %260 = vmatpush2.xpose.msra.mxu0 0.0
    %261 = vmatprep.subr.mxu0 0.0
    %262 = vmatpush2.xpose.msra.mxu0 0.0
    %263 = vmatprep.subr.mxu0 0.0
    %264 = vmatpush2.xpose.msra.mxu0 0.0
    %265 = vmatprep.subr.mxu0 0.0
    %266 = vmatpush2.xpose.msra.mxu0 0.0
    %267 = vmatprep.subr.mxu0 0.0
    %268 = vmatpush2.xpose.msra.mxu0 0.0
    %269 = vmatprep.subr.mxu0 0.0
    %270 = vmatpush2.xpose.msra.mxu0 0.0
    %271 = vmatprep.subr.mxu0 0.0
    %272 = vmatpush2.xpose.msra.mxu0 0.0
    %273 = vmatprep.subr.mxu0 0.0
    %274 = vmatpush2.xpose.msra.mxu0 0.0
    %275 = vmatprep.subr.mxu0 0.0
    %276 = vmatpush2.xpose.msra.mxu0 0.0
    %277 = vmatprep.subr.mxu0 0.0
    %278 = vmatpush2.xpose.msra.mxu0 0.0
    %279 = vmatprep.subr.mxu0 0.0
    %280 = vmatpush2.xpose.msra.mxu0 0.0
    %281 = vmatprep.mubr.f32.mxu0 0.0
    %282 = vmatmul.mubr.f32.gmra.mxu0 %v209
    %v283 = vpop.f32.mrf.mxu0
    %v284 = vadd.f32 %v202, %v283
    %v285 = vpop.f32.mrf.mxu0
    %286 = vmatprep.mubr.f32.mxu0 0.0
    %287 = vmatmul.mubr.f32.gmra.mxu0 %v211
    %v288 = vpop.f32.mrf.mxu0
    %v289 = vadd.f32 %v203, %v288
    %v290 = vpop.f32.mrf.mxu0
    %291 = vdwg.mxu0
    %292 = vrot.lane.b32.xlu0 %v191, 96
    %v293 = vpop.permute.xlu0 %292
    %294 = vrot.lane.b32.xlu0 %v193, 96
    %v295 = vpop.permute.xlu0 %294
    %v296 = vsel %vm208, %v191, 0
    %v298 = vsel %vm208, %v193, 0
    %v300 = vsel %vm208, %v293, 0
    %v302 = vsel %vm208, %v295, 0
    %304 = vmatprep.subr.mxu0 0.0
    %305 = vmatpush1.xpose.msra.mxu0 0.0
    %306 = vmatprep.subr.mxu0 0.0
    %307 = vmatpush1.xpose.msra.mxu0 0.0
    %308 = vmatprep.subr.mxu0 0.0
    %309 = vmatpush1.xpose.msra.mxu0 0.0
    %310 = vmatprep.subr.mxu0 0.0
    %311 = vmatpush1.xpose.msra.mxu0 0.0
    %312 = vmatprep.subr.mxu0 0.0
    %313 = vmatpush1.xpose.msra.mxu0 0.0
    %314 = vmatprep.subr.mxu0 0.0
    %315 = vmatpush1.xpose.msra.mxu0 0.0
    %316 = vmatprep.subr.mxu0 0.0
    %317 = vmatpush1.xpose.msra.mxu0 0.0
    %318 = vmatprep.subr.mxu0 0.0
    %319 = vmatpush1.xpose.msra.mxu0 0.0
    %320 = vmatprep.subr.mxu0 0.0
    %321 = vmatpush1.xpose.msra.mxu0 0.0
    %322 = vmatprep.subr.mxu0 0.0
    %323 = vmatpush1.xpose.msra.mxu0 0.0
    %324 = vmatprep.subr.mxu0 0.0
    %325 = vmatpush1.xpose.msra.mxu0 0.0
    %326 = vmatprep.subr.mxu0 0.0
    %327 = vmatpush1.xpose.msra.mxu0 0.0
    %328 = vmatprep.subr.mxu0 0.0
    %329 = vmatpush1.xpose.msra.mxu0 0.0
    %330 = vmatprep.subr.mxu0 0.0
    %331 = vmatpush1.xpose.msra.mxu0 0.0
    %332 = vmatprep.subr.mxu0 0.0
    %333 = vmatpush1.xpose.msra.mxu0 %v302
    %334 = vmatprep.subr.mxu0 0.0
    %335 = vmatpush1.xpose.msra.mxu0 %v300
    %336 = vmatprep.subr.mxu0 0.0
    %337 = vmatpush2.xpose.msra.mxu0 0.0
    %338 = vmatprep.subr.mxu0 0.0
    %339 = vmatpush2.xpose.msra.mxu0 0.0
    %340 = vmatprep.subr.mxu0 0.0
    %341 = vmatpush2.xpose.msra.mxu0 0.0
    %342 = vmatprep.subr.mxu0 0.0
    %343 = vmatpush2.xpose.msra.mxu0 0.0
    %344 = vmatprep.subr.mxu0 0.0
    %345 = vmatpush2.xpose.msra.mxu0 0.0
    %346 = vmatprep.subr.mxu0 0.0
    %347 = vmatpush2.xpose.msra.mxu0 0.0
    %348 = vmatprep.subr.mxu0 0.0
    %349 = vmatpush2.xpose.msra.mxu0 0.0
    %350 = vmatprep.subr.mxu0 0.0
    %351 = vmatpush2.xpose.msra.mxu0 0.0
    %352 = vmatprep.subr.mxu0 0.0
    %353 = vmatpush2.xpose.msra.mxu0 0.0
    %354 = vmatprep.subr.mxu0 0.0
    %355 = vmatpush2.xpose.msra.mxu0 0.0
    %356 = vmatprep.subr.mxu0 0.0
    %357 = vmatpush2.xpose.msra.mxu0 0.0
    %358 = vmatprep.subr.mxu0 0.0
    %359 = vmatpush2.xpose.msra.mxu0 0.0
    %360 = vmatprep.subr.mxu0 0.0
    %361 = vmatpush2.xpose.msra.mxu0 0.0
    %362 = vmatprep.subr.mxu0 0.0
    %363 = vmatpush2.xpose.msra.mxu0 0.0
    %364 = vmatprep.subr.mxu0 0.0
    %365 = vmatpush2.xpose.msra.mxu0 0.0
    %366 = vmatprep.subr.mxu0 0.0
    %367 = vmatpush2.xpose.msra.mxu0 0.0
    %368 = vmatprep.mubr.f32.mxu0 0.0
    %369 = vmatmul.mubr.f32.gmra.mxu0 %v296
    %v370 = vpop.f32.mrf.mxu0
    %v371 = vadd.f32 %v202, %v370
    %v372 = vpop.f32.mrf.mxu0
    %373 = vmatprep.mubr.f32.mxu0 0.0
    %374 = vmatmul.mubr.f32.gmra.mxu0 %v298
    %v375 = vpop.f32.mrf.mxu0
    %v376 = vadd.f32 %v203, %v375
    %v377 = vpop.f32.mrf.mxu0
    %378 = vdwg.mxu0
    %379 = vrot.lane.b32.xlu0 %v195, 96
    %v380 = vpop.permute.xlu0 %379
    %381 = vrot.lane.b32.xlu0 %v197, 96
    %v382 = vpop.permute.xlu0 %381
    %v383 = vsel %vm208, %v195, 0
    %v385 = vsel %vm208, %v197, 0
    %v387 = vsel %vm208, %v380, 0
    %v389 = vsel %vm208, %v382, 0
    %391 = vmatprep.subr.mxu0 0.0
    %392 = vmatpush1.xpose.msra.mxu0 0.0
    %393 = vmatprep.subr.mxu0 0.0
    %394 = vmatpush1.xpose.msra.mxu0 0.0
    %395 = vmatprep.subr.mxu0 0.0
    %396 = vmatpush1.xpose.msra.mxu0 0.0
    %397 = vmatprep.subr.mxu0 0.0
    %398 = vmatpush1.xpose.msra.mxu0 0.0
    %399 = vmatprep.subr.mxu0 0.0
    %400 = vmatpush1.xpose.msra.mxu0 0.0
    %401 = vmatprep.subr.mxu0 0.0
    %402 = vmatpush1.xpose.msra.mxu0 0.0
    %403 = vmatprep.subr.mxu0 0.0
    %404 = vmatpush1.xpose.msra.mxu0 0.0
    %405 = vmatprep.subr.mxu0 0.0
    %406 = vmatpush1.xpose.msra.mxu0 0.0
    %407 = vmatprep.subr.mxu0 0.0
    %408 = vmatpush1.xpose.msra.mxu0 0.0
    %409 = vmatprep.subr.mxu0 0.0
    %410 = vmatpush1.xpose.msra.mxu0 0.0
    %411 = vmatprep.subr.mxu0 0.0
    %412 = vmatpush1.xpose.msra.mxu0 0.0
    %413 = vmatprep.subr.mxu0 0.0
    %414 = vmatpush1.xpose.msra.mxu0 0.0
    %415 = vmatprep.subr.mxu0 0.0
    %416 = vmatpush1.xpose.msra.mxu0 0.0
    %417 = vmatprep.subr.mxu0 0.0
    %418 = vmatpush1.xpose.msra.mxu0 0.0
    %419 = vmatprep.subr.mxu0 0.0
    %420 = vmatpush1.xpose.msra.mxu0 %v389
    %421 = vmatprep.subr.mxu0 0.0
    %422 = vmatpush1.xpose.msra.mxu0 %v387
    %423 = vmatprep.subr.mxu0 0.0
    %424 = vmatpush2.xpose.msra.mxu0 0.0
    %425 = vmatprep.subr.mxu0 0.0
    %426 = vmatpush2.xpose.msra.mxu0 0.0
    %427 = vmatprep.subr.mxu0 0.0
    %428 = vmatpush2.xpose.msra.mxu0 0.0
    %429 = vmatprep.subr.mxu0 0.0
    %430 = vmatpush2.xpose.msra.mxu0 0.0
    %431 = vmatprep.subr.mxu0 0.0
    %432 = vmatpush2.xpose.msra.mxu0 0.0
    %433 = vmatprep.subr.mxu0 0.0
    %434 = vmatpush2.xpose.msra.mxu0 0.0
    %435 = vmatprep.subr.mxu0 0.0
    %436 = vmatpush2.xpose.msra.mxu0 0.0
    %437 = vmatprep.subr.mxu0 0.0
    %438 = vmatpush2.xpose.msra.mxu0 0.0
    %439 = vmatprep.subr.mxu0 0.0
    %440 = vmatpush2.xpose.msra.mxu0 0.0
    %441 = vmatprep.subr.mxu0 0.0
    %442 = vmatpush2.xpose.msra.mxu0 0.0
    %443 = vmatprep.subr.mxu0 0.0
    %444 = vmatpush2.xpose.msra.mxu0 0.0
    %445 = vmatprep.subr.mxu0 0.0
    %446 = vmatpush2.xpose.msra.mxu0 0.0
    %447 = vmatprep.subr.mxu0 0.0
    %448 = vmatpush2.xpose.msra.mxu0 0.0
    %449 = vmatprep.subr.mxu0 0.0
    %450 = vmatpush2.xpose.msra.mxu0 0.0
    %451 = vmatprep.subr.mxu0 0.0
    %452 = vmatpush2.xpose.msra.mxu0 0.0
    %453 = vmatprep.subr.mxu0 0.0
    %454 = vmatpush2.xpose.msra.mxu0 0.0
    %455 = vmatprep.mubr.f32.mxu0 0.0
    %456 = vmatmul.mubr.f32.gmra.mxu0 %v383
    %v457 = vpop.f32.mrf.mxu0
    %v458 = vadd.f32 %v202, %v457
    %v459 = vpop.f32.mrf.mxu0
    %460 = vmatprep.mubr.f32.mxu0 0.0
    %461 = vmatmul.mubr.f32.gmra.mxu0 %v385
    %v462 = vpop.f32.mrf.mxu0
    %v463 = vadd.f32 %v203, %v462
    %v464 = vpop.f32.mrf.mxu0
    %465 = vdwg.mxu0
    %466 = vrot.lane.b32.xlu0 %v199, 96
    %v467 = vpop.permute.xlu0 %466
    %468 = vrot.lane.b32.xlu0 %v201, 96
    %v469 = vpop.permute.xlu0 %468
    %v470 = vsel %vm208, %v199, 0
    %v472 = vsel %vm208, %v201, 0
    %v474 = vsel %vm208, %v467, 0
    %v476 = vsel %vm208, %v469, 0
    %478 = vmatprep.subr.mxu0 0.0
    %479 = vmatpush1.xpose.msra.mxu0 0.0
    %480 = vmatprep.subr.mxu0 0.0
    %481 = vmatpush1.xpose.msra.mxu0 0.0
    %482 = vmatprep.subr.mxu0 0.0
    %483 = vmatpush1.xpose.msra.mxu0 0.0
    %484 = vmatprep.subr.mxu0 0.0
    %485 = vmatpush1.xpose.msra.mxu0 0.0
    %486 = vmatprep.subr.mxu0 0.0
    %487 = vmatpush1.xpose.msra.mxu0 0.0
    %488 = vmatprep.subr.mxu0 0.0
    %489 = vmatpush1.xpose.msra.mxu0 0.0
    %490 = vmatprep.subr.mxu0 0.0
    %491 = vmatpush1.xpose.msra.mxu0 0.0
    %492 = vmatprep.subr.mxu0 0.0
    %493 = vmatpush1.xpose.msra.mxu0 0.0
    %494 = vmatprep.subr.mxu0 0.0
    %495 = vmatpush1.xpose.msra.mxu0 0.0
    %496 = vmatprep.subr.mxu0 0.0
    %497 = vmatpush1.xpose.msra.mxu0 0.0
    %498 = vmatprep.subr.mxu0 0.0
    %499 = vmatpush1.xpose.msra.mxu0 0.0
    %500 = vmatprep.subr.mxu0 0.0
    %501 = vmatpush1.xpose.msra.mxu0 0.0
    %502 = vmatprep.subr.mxu0 0.0
    %503 = vmatpush1.xpose.msra.mxu0 0.0
    %504 = vmatprep.subr.mxu0 0.0
    %505 = vmatpush1.xpose.msra.mxu0 0.0
    %506 = vmatprep.subr.mxu0 0.0
    %507 = vmatpush1.xpose.msra.mxu0 %v476
    %508 = vmatprep.subr.mxu0 0.0
    %509 = vmatpush1.xpose.msra.mxu0 %v474
    %510 = vmatprep.subr.mxu0 0.0
    %511 = vmatpush2.xpose.msra.mxu0 0.0
    %512 = vmatprep.subr.mxu0 0.0
    %513 = vmatpush2.xpose.msra.mxu0 0.0
    %514 = vmatprep.subr.mxu0 0.0
    %515 = vmatpush2.xpose.msra.mxu0 0.0
    %516 = vmatprep.subr.mxu0 0.0
    %517 = vmatpush2.xpose.msra.mxu0 0.0
    %518 = vmatprep.subr.mxu0 0.0
    %519 = vmatpush2.xpose.msra.mxu0 0.0
    %520 = vmatprep.subr.mxu0 0.0
    %521 = vmatpush2.xpose.msra.mxu0 0.0
    %522 = vmatprep.subr.mxu0 0.0
    %523 = vmatpush2.xpose.msra.mxu0 0.0
    %524 = vmatprep.subr.mxu0 0.0
    %525 = vmatpush2.xpose.msra.mxu0 0.0
    %526 = vmatprep.subr.mxu0 0.0
    %527 = vmatpush2.xpose.msra.mxu0 0.0
    %528 = vmatprep.subr.mxu0 0.0
    %529 = vmatpush2.xpose.msra.mxu0 0.0
    %530 = vmatprep.subr.mxu0 0.0
    %531 = vmatpush2.xpose.msra.mxu0 0.0
    %532 = vmatprep.subr.mxu0 0.0
    %533 = vmatpush2.xpose.msra.mxu0 0.0
    %534 = vmatprep.subr.mxu0 0.0
    %535 = vmatpush2.xpose.msra.mxu0 0.0
    %536 = vmatprep.subr.mxu0 0.0
    %537 = vmatpush2.xpose.msra.mxu0 0.0
    %538 = vmatprep.subr.mxu0 0.0
    %539 = vmatpush2.xpose.msra.mxu0 0.0
    %540 = vmatprep.subr.mxu0 0.0
    %541 = vmatpush2.xpose.msra.mxu0 0.0
    %542 = vmatprep.mubr.f32.mxu0 0.0
    %543 = vmatmul.mubr.f32.gmra.mxu0 %v470
    %v544 = vpop.f32.mrf.mxu0
    %v545 = vadd.f32 %v202, %v544
    %v546 = vpop.f32.mrf.mxu0
    %547 = vmatprep.mubr.f32.mxu0 0.0
    %548 = vmatmul.mubr.f32.gmra.mxu0 %v472
    %v549 = vpop.f32.mrf.mxu0
    %v550 = vadd.f32 %v203, %v549
    %v551 = vpop.f32.mrf.mxu0
    %552 = vdwg.mxu0
    %vm553 = vcmask 130048
    %v554 = vsel %vm553, %v284, -inf
    %555 = vmax.xlane.f32.xlu0 %v554
    %v556 = vpop.xlane.xlu0 %555
    %v557 = vsel %vm553, %v289, -inf
    %558 = vmax.xlane.f32.xlu0 %v557
    %v559 = vpop.xlane.xlu0 %558
    %v560 = vsel %vm553, %v371, -inf
    %561 = vmax.xlane.f32.xlu0 %v560
    %v562 = vpop.xlane.xlu0 %561
    %v563 = vsel %vm553, %v376, -inf
    %564 = vmax.xlane.f32.xlu0 %v563
    %v565 = vpop.xlane.xlu0 %564
    %v566 = vsel %vm553, %v458, -inf
    %567 = vmax.xlane.f32.xlu0 %v566
    %v568 = vpop.xlane.xlu0 %567
    %v569 = vsel %vm553, %v463, -inf
    %570 = vmax.xlane.f32.xlu0 %v569
    %v571 = vpop.xlane.xlu0 %570
    %v572 = vsel %vm553, %v545, -inf
    %573 = vmax.xlane.f32.xlu0 %v572
    %v574 = vpop.xlane.xlu0 %573
    %v575 = vsel %vm553, %v550, -inf
    %576 = vmax.xlane.f32.xlu0 %v575
    %v577 = vpop.xlane.xlu0 %576
    %v578 = vsub.f32 %v284, %v556
    %v579 = vsub.f32 %v289, %v559
    %v580 = vsub.f32 %v371, %v562
    %v581 = vsub.f32 %v376, %v565
    %v582 = vsub.f32 %v458, %v568
    %v583 = vsub.f32 %v463, %v571
    %v584 = vsub.f32 %v545, %v574
    %v585 = vsub.f32 %v550, %v577
    %v586 = vmul.f32 %v578, 1.442695
    %v587 = vpow.pop %v586
    %v588 = vmul.f32 %v579, 1.442695
    %v589 = vpow.pop %v588
    %v590 = vmul.f32 %v580, 1.442695
    %v591 = vpow.pop %v590
    %v592 = vmul.f32 %v581, 1.442695
    %v593 = vpow.pop %v592
    %v594 = vmul.f32 %v582, 1.442695
    %v595 = vpow.pop %v594
    %v596 = vmul.f32 %v583, 1.442695
    %v597 = vpow.pop %v596
    %v598 = vmul.f32 %v584, 1.442695
    %v599 = vpow.pop %v598
    %v600 = vmul.f32 %v585, 1.442695
    %v601 = vpow.pop %v600
    %v602 = vsel %vm553, %v587, 0.0
    %603 = vadd.xlane.f32.xlu0 %v602
    %v604 = vpop.xlane.xlu0 %603
    %v605 = vsel %vm553, %v589, 0.0
    %606 = vadd.xlane.f32.xlu0 %v605
    %v607 = vpop.xlane.xlu0 %606
    %v608 = vsel %vm553, %v591, 0.0
    %609 = vadd.xlane.f32.xlu0 %v608
    %v610 = vpop.xlane.xlu0 %609
    %v611 = vsel %vm553, %v593, 0.0
    %612 = vadd.xlane.f32.xlu0 %v611
    %v613 = vpop.xlane.xlu0 %612
    %v614 = vsel %vm553, %v595, 0.0
    %615 = vadd.xlane.f32.xlu0 %v614
    %v616 = vpop.xlane.xlu0 %615
    %v617 = vsel %vm553, %v597, 0.0
    %618 = vadd.xlane.f32.xlu0 %v617
    %v619 = vpop.xlane.xlu0 %618
    %v620 = vsel %vm553, %v599, 0.0
    %621 = vadd.xlane.f32.xlu0 %v620
    %v622 = vpop.xlane.xlu0 %621
    %v623 = vsel %vm553, %v601, 0.0
    %624 = vadd.xlane.f32.xlu0 %v623
    %v625 = vpop.xlane.xlu0 %624
    %v626 = vrcp.pop %v604
    %v627 = vmul.f32 %v587, %v626
    %v628 = vrcp.pop %v607
    %v629 = vmul.f32 %v589, %v628
    %v630 = vrcp.pop %v610
    %v631 = vmul.f32 %v591, %v630
    %v632 = vrcp.pop %v613
    %v633 = vmul.f32 %v593, %v632
    %v634 = vrcp.pop %v616
    %v635 = vmul.f32 %v595, %v634
    %v636 = vrcp.pop %v619
    %v637 = vmul.f32 %v597, %v636
    %v638 = vrcp.pop %v622
    %v639 = vmul.f32 %v599, %v638
    %v640 = vrcp.pop %v625
    %v641 = vmul.f32 %v601, %v640
    %642 = vrot.lane.b32.xlu0 %v180, 64
    %v643 = vpop.permute.xlu0 %642
    %644 = vrot.lane.b32.xlu0 %v185, 64
    %v645 = vpop.permute.xlu0 %644
    %v649 = vsel %vm553, %v627, 0
    %v652 = vsel %vm553, %v629, 0
    %654 = vmatprep.subr.mxu0 0.0
    %655 = vmatpush1.msra.mxu0 0.0
    %656 = vmatprep.subr.mxu0 0.0
    %657 = vmatpush1.msra.mxu0 0.0
    %658 = vmatprep.subr.mxu0 0.0
    %659 = vmatpush1.msra.mxu0 0.0
    %660 = vmatprep.subr.mxu0 0.0
    %661 = vmatpush1.msra.mxu0 0.0
    %662 = vmatprep.subr.mxu0 0.0
    %663 = vmatpush1.msra.mxu0 0.0
    %664 = vmatprep.subr.mxu0 0.0
    %665 = vmatpush1.msra.mxu0 0.0
    %666 = vmatprep.subr.mxu0 0.0
    %667 = vmatpush1.msra.mxu0 0.0
    %668 = vmatprep.subr.mxu0 0.0
    %669 = vmatpush1.msra.mxu0 0.0
    %670 = vmatprep.subr.mxu0 0.0
    %671 = vmatpush1.msra.mxu0 0.0
    %672 = vmatprep.subr.mxu0 0.0
    %673 = vmatpush1.msra.mxu0 0.0
    %674 = vmatprep.subr.mxu0 0.0
    %675 = vmatpush1.msra.mxu0 0.0
    %676 = vmatprep.subr.mxu0 0.0
    %677 = vmatpush1.msra.mxu0 0.0
    %678 = vmatprep.subr.mxu0 0.0
    %679 = vmatpush1.msra.mxu0 0.0
    %680 = vmatprep.subr.mxu0 0.0
    %681 = vmatpush1.msra.mxu0 0.0
    %682 = vmatprep.subr.mxu0 0.0
    %683 = vmatpush1.msra.mxu0 %v645
    %684 = vmatprep.subr.mxu0 0.0
    %685 = vmatpush1.msra.mxu0 %v643
    %686 = vmatprep.subr.mxu0 0.0
    %687 = vmatpush2.msra.mxu0 0.0
    %688 = vmatprep.subr.mxu0 0.0
    %689 = vmatpush2.msra.mxu0 0.0
    %690 = vmatprep.subr.mxu0 0.0
    %691 = vmatpush2.msra.mxu0 0.0
    %692 = vmatprep.subr.mxu0 0.0
    %693 = vmatpush2.msra.mxu0 0.0
    %694 = vmatprep.subr.mxu0 0.0
    %695 = vmatpush2.msra.mxu0 0.0
    %696 = vmatprep.subr.mxu0 0.0
    %697 = vmatpush2.msra.mxu0 0.0
    %698 = vmatprep.subr.mxu0 0.0
    %699 = vmatpush2.msra.mxu0 0.0
    %700 = vmatprep.subr.mxu0 0.0
    %701 = vmatpush2.msra.mxu0 0.0
    %702 = vmatprep.subr.mxu0 0.0
    %703 = vmatpush2.msra.mxu0 0.0
    %704 = vmatprep.subr.mxu0 0.0
    %705 = vmatpush2.msra.mxu0 0.0
    %706 = vmatprep.subr.mxu0 0.0
    %707 = vmatpush2.msra.mxu0 0.0
    %708 = vmatprep.subr.mxu0 0.0
    %709 = vmatpush2.msra.mxu0 0.0
    %710 = vmatprep.subr.mxu0 0.0
    %711 = vmatpush2.msra.mxu0 0.0
    %712 = vmatprep.subr.mxu0 0.0
    %713 = vmatpush2.msra.mxu0 0.0
    %714 = vmatprep.subr.mxu0 0.0
    %715 = vmatpush2.msra.mxu0 0.0
    %716 = vmatprep.subr.mxu0 0.0
    %717 = vmatpush2.msra.mxu0 0.0
    %718 = vmatprep.mubr.f32.mxu0 0.0
    %719 = vmatmul.mubr.f32.gmra.mxu0 %v649
    %v720 = vpop.f32.mrf.mxu0
    %v721 = vadd.f32 0.0, %v720
    %v722 = vpop.f32.mrf.mxu0
    %723 = vmatprep.mubr.f32.mxu0 0.0
    %724 = vmatmul.mubr.f32.gmra.mxu0 %v652
    %v725 = vpop.f32.mrf.mxu0
    %v726 = vadd.f32 0.0, %v725
    %v727 = vpop.f32.mrf.mxu0
    %728 = vdwg.mxu0
    %729 = vrot.lane.b32.xlu0 %v191, 64
    %v730 = vpop.permute.xlu0 %729
    %731 = vrot.lane.b32.xlu0 %v193, 64
    %v732 = vpop.permute.xlu0 %731
    %v736 = vsel %vm553, %v631, 0
    %v739 = vsel %vm553, %v633, 0
    %741 = vmatprep.subr.mxu0 0.0
    %742 = vmatpush1.msra.mxu0 0.0
    %743 = vmatprep.subr.mxu0 0.0
    %744 = vmatpush1.msra.mxu0 0.0
    %745 = vmatprep.subr.mxu0 0.0
    %746 = vmatpush1.msra.mxu0 0.0
    %747 = vmatprep.subr.mxu0 0.0
    %748 = vmatpush1.msra.mxu0 0.0
    %749 = vmatprep.subr.mxu0 0.0
    %750 = vmatpush1.msra.mxu0 0.0
    %751 = vmatprep.subr.mxu0 0.0
    %752 = vmatpush1.msra.mxu0 0.0
    %753 = vmatprep.subr.mxu0 0.0
    %754 = vmatpush1.msra.mxu0 0.0
    %755 = vmatprep.subr.mxu0 0.0
    %756 = vmatpush1.msra.mxu0 0.0
    %757 = vmatprep.subr.mxu0 0.0
    %758 = vmatpush1.msra.mxu0 0.0
    %759 = vmatprep.subr.mxu0 0.0
    %760 = vmatpush1.msra.mxu0 0.0
    %761 = vmatprep.subr.mxu0 0.0
    %762 = vmatpush1.msra.mxu0 0.0
    %763 = vmatprep.subr.mxu0 0.0
    %764 = vmatpush1.msra.mxu0 0.0
    %765 = vmatprep.subr.mxu0 0.0
    %766 = vmatpush1.msra.mxu0 0.0
    %767 = vmatprep.subr.mxu0 0.0
    %768 = vmatpush1.msra.mxu0 0.0
    %769 = vmatprep.subr.mxu0 0.0
    %770 = vmatpush1.msra.mxu0 %v732
    %771 = vmatprep.subr.mxu0 0.0
    %772 = vmatpush1.msra.mxu0 %v730
    %773 = vmatprep.subr.mxu0 0.0
    %774 = vmatpush2.msra.mxu0 0.0
    %775 = vmatprep.subr.mxu0 0.0
    %776 = vmatpush2.msra.mxu0 0.0
    %777 = vmatprep.subr.mxu0 0.0
    %778 = vmatpush2.msra.mxu0 0.0
    %779 = vmatprep.subr.mxu0 0.0
    %780 = vmatpush2.msra.mxu0 0.0
    %781 = vmatprep.subr.mxu0 0.0
    %782 = vmatpush2.msra.mxu0 0.0
    %783 = vmatprep.subr.mxu0 0.0
    %784 = vmatpush2.msra.mxu0 0.0
    %785 = vmatprep.subr.mxu0 0.0
    %786 = vmatpush2.msra.mxu0 0.0
    %787 = vmatprep.subr.mxu0 0.0
    %788 = vmatpush2.msra.mxu0 0.0
    %789 = vmatprep.subr.mxu0 0.0
    %790 = vmatpush2.msra.mxu0 0.0
    %791 = vmatprep.subr.mxu0 0.0
    %792 = vmatpush2.msra.mxu0 0.0
    %793 = vmatprep.subr.mxu0 0.0
    %794 = vmatpush2.msra.mxu0 0.0
    %795 = vmatprep.subr.mxu0 0.0
    %796 = vmatpush2.msra.mxu0 0.0
    %797 = vmatprep.subr.mxu0 0.0
    %798 = vmatpush2.msra.mxu0 0.0
    %799 = vmatprep.subr.mxu0 0.0
    %800 = vmatpush2.msra.mxu0 0.0
    %801 = vmatprep.subr.mxu0 0.0
    %802 = vmatpush2.msra.mxu0 0.0
    %803 = vmatprep.subr.mxu0 0.0
    %804 = vmatpush2.msra.mxu0 0.0
    %805 = vmatprep.mubr.f32.mxu0 0.0
    %806 = vmatmul.mubr.f32.gmra.mxu0 %v736
    %v807 = vpop.f32.mrf.mxu0
    %v808 = vadd.f32 0.0, %v807
    %v809 = vpop.f32.mrf.mxu0
    %810 = vmatprep.mubr.f32.mxu0 0.0
    %811 = vmatmul.mubr.f32.gmra.mxu0 %v739
    %v812 = vpop.f32.mrf.mxu0
    %v813 = vadd.f32 0.0, %v812
    %v814 = vpop.f32.mrf.mxu0
    %815 = vdwg.mxu0
    %816 = vrot.lane.b32.xlu0 %v195, 64
    %v817 = vpop.permute.xlu0 %816
    %818 = vrot.lane.b32.xlu0 %v197, 64
    %v819 = vpop.permute.xlu0 %818
    %v823 = vsel %vm553, %v635, 0
    %v826 = vsel %vm553, %v637, 0
    %828 = vmatprep.subr.mxu0 0.0
    %829 = vmatpush1.msra.mxu0 0.0
    %830 = vmatprep.subr.mxu0 0.0
    %831 = vmatpush1.msra.mxu0 0.0
    %832 = vmatprep.subr.mxu0 0.0
    %833 = vmatpush1.msra.mxu0 0.0
    %834 = vmatprep.subr.mxu0 0.0
    %835 = vmatpush1.msra.mxu0 0.0
    %836 = vmatprep.subr.mxu0 0.0
    %837 = vmatpush1.msra.mxu0 0.0
    %838 = vmatprep.subr.mxu0 0.0
    %839 = vmatpush1.msra.mxu0 0.0
    %840 = vmatprep.subr.mxu0 0.0
    %841 = vmatpush1.msra.mxu0 0.0
    %842 = vmatprep.subr.mxu0 0.0
    %843 = vmatpush1.msra.mxu0 0.0
    %844 = vmatprep.subr.mxu0 0.0
    %845 = vmatpush1.msra.mxu0 0.0
    %846 = vmatprep.subr.mxu0 0.0
    %847 = vmatpush1.msra.mxu0 0.0
    %848 = vmatprep.subr.mxu0 0.0
    %849 = vmatpush1.msra.mxu0 0.0
    %850 = vmatprep.subr.mxu0 0.0
    %851 = vmatpush1.msra.mxu0 0.0
    %852 = vmatprep.subr.mxu0 0.0
    %853 = vmatpush1.msra.mxu0 0.0
    %854 = vmatprep.subr.mxu0 0.0
    %855 = vmatpush1.msra.mxu0 0.0
    %856 = vmatprep.subr.mxu0 0.0
    %857 = vmatpush1.msra.mxu0 %v819
    %858 = vmatprep.subr.mxu0 0.0
    %859 = vmatpush1.msra.mxu0 %v817
    %860 = vmatprep.subr.mxu0 0.0
    %861 = vmatpush2.msra.mxu0 0.0
    %862 = vmatprep.subr.mxu0 0.0
    %863 = vmatpush2.msra.mxu0 0.0
    %864 = vmatprep.subr.mxu0 0.0
    %865 = vmatpush2.msra.mxu0 0.0
    %866 = vmatprep.subr.mxu0 0.0
    %867 = vmatpush2.msra.mxu0 0.0
    %868 = vmatprep.subr.mxu0 0.0
    %869 = vmatpush2.msra.mxu0 0.0
    %870 = vmatprep.subr.mxu0 0.0
    %871 = vmatpush2.msra.mxu0 0.0
    %872 = vmatprep.subr.mxu0 0.0
    %873 = vmatpush2.msra.mxu0 0.0
    %874 = vmatprep.subr.mxu0 0.0
    %875 = vmatpush2.msra.mxu0 0.0
    %876 = vmatprep.subr.mxu0 0.0
    %877 = vmatpush2.msra.mxu0 0.0
    %878 = vmatprep.subr.mxu0 0.0
    %879 = vmatpush2.msra.mxu0 0.0
    %880 = vmatprep.subr.mxu0 0.0
    %881 = vmatpush2.msra.mxu0 0.0
    %882 = vmatprep.subr.mxu0 0.0
    %883 = vmatpush2.msra.mxu0 0.0
    %884 = vmatprep.subr.mxu0 0.0
    %885 = vmatpush2.msra.mxu0 0.0
    %886 = vmatprep.subr.mxu0 0.0
    %887 = vmatpush2.msra.mxu0 0.0
    %888 = vmatprep.subr.mxu0 0.0
    %889 = vmatpush2.msra.mxu0 0.0
    %890 = vmatprep.subr.mxu0 0.0
    %891 = vmatpush2.msra.mxu0 0.0
    %892 = vmatprep.mubr.f32.mxu0 0.0
    %893 = vmatmul.mubr.f32.gmra.mxu0 %v823
    %v894 = vpop.f32.mrf.mxu0
    %v895 = vadd.f32 0.0, %v894
    %v896 = vpop.f32.mrf.mxu0
    %897 = vmatprep.mubr.f32.mxu0 0.0
    %898 = vmatmul.mubr.f32.gmra.mxu0 %v826
    %v899 = vpop.f32.mrf.mxu0
    %v900 = vadd.f32 0.0, %v899
    %v901 = vpop.f32.mrf.mxu0
    %902 = vdwg.mxu0
    %903 = vrot.lane.b32.xlu0 %v199, 64
    %v904 = vpop.permute.xlu0 %903
    %905 = vrot.lane.b32.xlu0 %v201, 64
    %v906 = vpop.permute.xlu0 %905
    %v910 = vsel %vm553, %v639, 0
    %v913 = vsel %vm553, %v641, 0
    %915 = vmatprep.subr.mxu0 0.0
    %916 = vmatpush1.msra.mxu0 0.0
    %917 = vmatprep.subr.mxu0 0.0
    %918 = vmatpush1.msra.mxu0 0.0
    %919 = vmatprep.subr.mxu0 0.0
    %920 = vmatpush1.msra.mxu0 0.0
    %921 = vmatprep.subr.mxu0 0.0
    %922 = vmatpush1.msra.mxu0 0.0
    %923 = vmatprep.subr.mxu0 0.0
    %924 = vmatpush1.msra.mxu0 0.0
    %925 = vmatprep.subr.mxu0 0.0
    %926 = vmatpush1.msra.mxu0 0.0
    %927 = vmatprep.subr.mxu0 0.0
    %928 = vmatpush1.msra.mxu0 0.0
    %929 = vmatprep.subr.mxu0 0.0
    %930 = vmatpush1.msra.mxu0 0.0
    %931 = vmatprep.subr.mxu0 0.0
    %932 = vmatpush1.msra.mxu0 0.0
    %933 = vmatprep.subr.mxu0 0.0
    %934 = vmatpush1.msra.mxu0 0.0
    %935 = vmatprep.subr.mxu0 0.0
    %936 = vmatpush1.msra.mxu0 0.0
    %937 = vmatprep.subr.mxu0 0.0
    %938 = vmatpush1.msra.mxu0 0.0
    %939 = vmatprep.subr.mxu0 0.0
    %940 = vmatpush1.msra.mxu0 0.0
    %941 = vmatprep.subr.mxu0 0.0
    %942 = vmatpush1.msra.mxu0 0.0
    %943 = vmatprep.subr.mxu0 0.0
    %944 = vmatpush1.msra.mxu0 %v906
    %945 = vmatprep.subr.mxu0 0.0
    %946 = vmatpush1.msra.mxu0 %v904
    %947 = vmatprep.subr.mxu0 0.0
    %948 = vmatpush2.msra.mxu0 0.0
    %949 = vmatprep.subr.mxu0 0.0
    %950 = vmatpush2.msra.mxu0 0.0
    %951 = vmatprep.subr.mxu0 0.0
    %952 = vmatpush2.msra.mxu0 0.0
    %953 = vmatprep.subr.mxu0 0.0
    %954 = vmatpush2.msra.mxu0 0.0
    %955 = vmatprep.subr.mxu0 0.0
    %956 = vmatpush2.msra.mxu0 0.0
    %957 = vmatprep.subr.mxu0 0.0
    %958 = vmatpush2.msra.mxu0 0.0
    %959 = vmatprep.subr.mxu0 0.0
    %960 = vmatpush2.msra.mxu0 0.0
    %961 = vmatprep.subr.mxu0 0.0
    %962 = vmatpush2.msra.mxu0 0.0
    %963 = vmatprep.subr.mxu0 0.0
    %964 = vmatpush2.msra.mxu0 0.0
    %965 = vmatprep.subr.mxu0 0.0
    %966 = vmatpush2.msra.mxu0 0.0
    %967 = vmatprep.subr.mxu0 0.0
    %968 = vmatpush2.msra.mxu0 0.0
    %969 = vmatprep.subr.mxu0 0.0
    %970 = vmatpush2.msra.mxu0 0.0
    %971 = vmatprep.subr.mxu0 0.0
    %972 = vmatpush2.msra.mxu0 0.0
    %973 = vmatprep.subr.mxu0 0.0
    %974 = vmatpush2.msra.mxu0 0.0
    %975 = vmatprep.subr.mxu0 0.0
    %976 = vmatpush2.msra.mxu0 0.0
    %977 = vmatprep.subr.mxu0 0.0
    %978 = vmatpush2.msra.mxu0 0.0
    %979 = vmatprep.mubr.f32.mxu0 0.0
    %980 = vmatmul.mubr.f32.gmra.mxu0 %v910
    %v981 = vpop.f32.mrf.mxu0
    %v982 = vadd.f32 0.0, %v981
    %v983 = vpop.f32.mrf.mxu0
    %984 = vmatprep.mubr.f32.mxu0 0.0
    %985 = vmatmul.mubr.f32.gmra.mxu0 %v913
    %v986 = vpop.f32.mrf.mxu0
    %v987 = vadd.f32 0.0, %v986
    %v988 = vpop.f32.mrf.mxu0
    %989 = vdwg.mxu0
    %992 = vrot.lane.b32.xlu0 %v808, 8
    %v993 = vpop.permute.xlu0 %992
    %994 = vrot.lane.b32.xlu0 %v813, 8
    %v995 = vpop.permute.xlu0 %994
    %1000 = vrot.lane.b32.xlu0 %v895, 16
    %v1001 = vpop.permute.xlu0 %1000
    %1002 = vrot.lane.b32.xlu0 %v900, 16
    %v1003 = vpop.permute.xlu0 %1002
    %1008 = vrot.lane.b32.xlu0 %v982, 24
    %v1009 = vpop.permute.xlu0 %1008
    %1010 = vrot.lane.b32.xlu0 %v987, 24
    %v1011 = vpop.permute.xlu0 %1010
    %v1014 = vsel %vm208, %v721, %v993
    %v1015 = vsel %vm208, %v726, %v995
    %v1016 = vsel %vm553, %v1014, %v1001
    %v1017 = vsel %vm553, %v1015, %v1003
    %vm1018 = vcmask 195584
    %v1019 = vsel %vm1018, %v1016, %v1009
    %v1020 = vsel %vm1018, %v1017, %v1011
    %v1021 = vld [vmem:[%s6] sm:$0xff]
    %v1022 = vld [vmem:[%s6 + $0x8] sm:$0xff]
    %v1023 = vld [vmem:[%s6 + $0x10] sm:$0xff]
    %v1024 = vld [vmem:[%s6 + $0x18] sm:$0xff]
    %v1025 = vld [vmem:[%s7] sm:$0x1]
    %v1027 = vlaneseq
    %v1028 = vshrl.u32 %v1027, 7
    %v1029 = vsub.s32 0, %v1028
    %v1030 = vrot.slane %v1025, %v1029
    %v1033 = vsel %vm50, %v1019, 0
    %v1036 = vsel %vm50, %v1020, 0
    %1038 = vmatprep.subr.mxu0 0.0
    %1039 = vmatpush1.msra.mxu0 0.0
    %1040 = vmatprep.subr.mxu0 0.0
    %1041 = vmatpush1.msra.mxu0 0.0
    %1042 = vmatprep.subr.mxu0 0.0
    %1043 = vmatpush1.msra.mxu0 0.0
    %1044 = vmatprep.subr.mxu0 0.0
    %1045 = vmatpush1.msra.mxu0 0.0
    %1046 = vmatprep.subr.mxu0 0.0
    %1047 = vmatpush1.msra.mxu0 0.0
    %1048 = vmatprep.subr.mxu0 0.0
    %1049 = vmatpush1.msra.mxu0 0.0
    %1050 = vmatprep.subr.mxu0 0.0
    %1051 = vmatpush1.msra.mxu0 0.0
    %1052 = vmatprep.subr.mxu0 0.0
    %1053 = vmatpush1.msra.mxu0 0.0
    %1054 = vmatprep.subr.mxu0 0.0
    %1055 = vmatpush1.msra.mxu0 0.0
    %1056 = vmatprep.subr.mxu0 0.0
    %1057 = vmatpush1.msra.mxu0 0.0
    %1058 = vmatprep.subr.mxu0 0.0
    %1059 = vmatpush1.msra.mxu0 0.0
    %1060 = vmatprep.subr.mxu0 0.0
    %1061 = vmatpush1.msra.mxu0 0.0
    %1062 = vmatprep.subr.mxu0 0.0
    %1063 = vmatpush1.msra.mxu0 %v1024
    %1064 = vmatprep.subr.mxu0 0.0
    %1065 = vmatpush1.msra.mxu0 %v1023
    %1066 = vmatprep.subr.mxu0 0.0
    %1067 = vmatpush1.msra.mxu0 %v1022
    %1068 = vmatprep.subr.mxu0 0.0
    %1069 = vmatpush1.msra.mxu0 %v1021
    %1070 = vmatprep.subr.mxu0 0.0
    %1071 = vmatpush2.msra.mxu0 0.0
    %1072 = vmatprep.subr.mxu0 0.0
    %1073 = vmatpush2.msra.mxu0 0.0
    %1074 = vmatprep.subr.mxu0 0.0
    %1075 = vmatpush2.msra.mxu0 0.0
    %1076 = vmatprep.subr.mxu0 0.0
    %1077 = vmatpush2.msra.mxu0 0.0
    %1078 = vmatprep.subr.mxu0 0.0
    %1079 = vmatpush2.msra.mxu0 0.0
    %1080 = vmatprep.subr.mxu0 0.0
    %1081 = vmatpush2.msra.mxu0 0.0
    %1082 = vmatprep.subr.mxu0 0.0
    %1083 = vmatpush2.msra.mxu0 0.0
    %1084 = vmatprep.subr.mxu0 0.0
    %1085 = vmatpush2.msra.mxu0 0.0
    %1086 = vmatprep.subr.mxu0 0.0
    %1087 = vmatpush2.msra.mxu0 0.0
    %1088 = vmatprep.subr.mxu0 0.0
    %1089 = vmatpush2.msra.mxu0 0.0
    %1090 = vmatprep.subr.mxu0 0.0
    %1091 = vmatpush2.msra.mxu0 0.0
    %1092 = vmatprep.subr.mxu0 0.0
    %1093 = vmatpush2.msra.mxu0 0.0
    %1094 = vmatprep.subr.mxu0 0.0
    %1095 = vmatpush2.msra.mxu0 0.0
    %1096 = vmatprep.subr.mxu0 0.0
    %1097 = vmatpush2.msra.mxu0 0.0
    %1098 = vmatprep.subr.mxu0 0.0
    %1099 = vmatpush2.msra.mxu0 0.0
    %1100 = vmatprep.subr.mxu0 0.0
    %1101 = vmatpush2.msra.mxu0 0.0
    %1102 = vmatprep.mubr.f32.mxu0 0.0
    %1103 = vmatmul.mubr.f32.gmra.mxu0 %v1033
    %v1104 = vpop.f32.mrf.mxu0
    %v1105 = vadd.f32 %v1030, %v1104
    %v1106 = vpop.f32.mrf.mxu0
    %1107 = vmatprep.mubr.f32.mxu0 0.0
    %1108 = vmatmul.mubr.f32.gmra.mxu0 %v1036
    %v1109 = vpop.f32.mrf.mxu0
    %v1110 = vadd.f32 %v1030, %v1109
    %v1111 = vpop.f32.mrf.mxu0
    %1112 = vdwg.mxu0
    %v1113 = vadd.f32 %v48, %v1105
    %v1114 = vadd.f32 %v49, %v1110
    %v1115 = vsel %vm50, %v1113, 0.0
    %1116 = vadd.xlane.f32.xlu0 %v1115
    %v1117 = vpop.xlane.xlu0 %1116
    %v1118 = vsel %vm50, %v1114, 0.0
    %1119 = vadd.xlane.f32.xlu0 %v1118
    %v1120 = vpop.xlane.xlu0 %1119
    %v1121 = vmul.f32 %v1117, %v57
    %v1122 = vmul.f32 %v1120, %v57
    %v1123 = vsub.f32 %v1113, %v1121
    %v1124 = vsub.f32 %v1114, %v1122
    %v1125 = vmul.f32 %v1123, %v1123
    %v1126 = vmul.f32 %v1124, %v1124
    %v1127 = vsel %vm50, %v1125, 0.0
    %1128 = vadd.xlane.f32.xlu0 %v1127
    %v1129 = vpop.xlane.xlu0 %1128
    %v1130 = vsel %vm50, %v1126, 0.0
    %1131 = vadd.xlane.f32.xlu0 %v1130
    %v1132 = vpop.xlane.xlu0 %1131
    %v1133 = vmul.f32 %v1129, %v57
    %v1134 = vmul.f32 %v1132, %v57
    %v1135 = vadd.f32 %v1133, 1e-05
    %v1136 = vadd.f32 %v1134, 1e-05
    %v1137 = vrsqrt.pop %v1135
    %v1138 = vrsqrt.pop %v1136
    %v1139 = vmul.f32 %v1123, %v1137
    %v1140 = vmul.f32 %v1124, %v1138
    %v1141 = vld [vmem:[%s8] sm:$0x1]
    %v1143 = vlaneseq
    %v1144 = vshrl.u32 %v1143, 7
    %v1145 = vsub.s32 0, %v1144
    %v1146 = vrot.slane %v1141, %v1145
    %v1148 = vmul.f32 %v1139, %v1146
    %v1149 = vmul.f32 %v1140, %v1146
    %v1150 = vld [vmem:[%s9] sm:$0x1]
    %v1152 = vlaneseq
    %v1153 = vshrl.u32 %v1152, 7
    %v1154 = vsub.s32 0, %v1153
    %v1155 = vrot.slane %v1150, %v1154
    %v1157 = vadd.f32 %v1148, %v1155
    %v1158 = vadd.f32 %v1149, %v1155
    %v1159 = vld [vmem:[%s10] sm:$0xff]
    %v1160 = vld [vmem:[%s10 + $0x8] sm:$0xff]
    %v1161 = vld [vmem:[%s10 + $0x10] sm:$0xff]
    %v1162 = vld [vmem:[%s10 + $0x18] sm:$0xff]
    %v1163 = vld [vmem:[%s11] sm:$0x1]
    %v1165 = vlaneseq
    %v1166 = vshrl.u32 %v1165, 7
    %v1167 = vsub.s32 0, %v1166
    %v1168 = vrot.slane %v1163, %v1167
    %v1171 = vsel %vm50, %v1157, 0
    %v1174 = vsel %vm50, %v1158, 0
    %1176 = vmatprep.subr.mxu0 0.0
    %1177 = vmatpush1.msra.mxu0 0.0
    %1178 = vmatprep.subr.mxu0 0.0
    %1179 = vmatpush1.msra.mxu0 0.0
    %1180 = vmatprep.subr.mxu0 0.0
    %1181 = vmatpush1.msra.mxu0 0.0
    %1182 = vmatprep.subr.mxu0 0.0
    %1183 = vmatpush1.msra.mxu0 0.0
    %1184 = vmatprep.subr.mxu0 0.0
    %1185 = vmatpush1.msra.mxu0 0.0
    %1186 = vmatprep.subr.mxu0 0.0
    %1187 = vmatpush1.msra.mxu0 0.0
    %1188 = vmatprep.subr.mxu0 0.0
    %1189 = vmatpush1.msra.mxu0 0.0
    %1190 = vmatprep.subr.mxu0 0.0
    %1191 = vmatpush1.msra.mxu0 0.0
    %1192 = vmatprep.subr.mxu0 0.0
    %1193 = vmatpush1.msra.mxu0 0.0
    %1194 = vmatprep.subr.mxu0 0.0
    %1195 = vmatpush1.msra.mxu0 0.0
    %1196 = vmatprep.subr.mxu0 0.0
    %1197 = vmatpush1.msra.mxu0 0.0
    %1198 = vmatprep.subr.mxu0 0.0
    %1199 = vmatpush1.msra.mxu0 0.0
    %1200 = vmatprep.subr.mxu0 0.0
    %1201 = vmatpush1.msra.mxu0 %v1162
    %1202 = vmatprep.subr.mxu0 0.0
    %1203 = vmatpush1.msra.mxu0 %v1161
    %1204 = vmatprep.subr.mxu0 0.0
    %1205 = vmatpush1.msra.mxu0 %v1160
    %1206 = vmatprep.subr.mxu0 0.0
    %1207 = vmatpush1.msra.mxu0 %v1159
    %1208 = vmatprep.subr.mxu0 0.0
    %1209 = vmatpush2.msra.mxu0 0.0
    %1210 = vmatprep.subr.mxu0 0.0
    %1211 = vmatpush2.msra.mxu0 0.0
    %1212 = vmatprep.subr.mxu0 0.0
    %1213 = vmatpush2.msra.mxu0 0.0
    %1214 = vmatprep.subr.mxu0 0.0
    %1215 = vmatpush2.msra.mxu0 0.0
    %1216 = vmatprep.subr.mxu0 0.0
    %1217 = vmatpush2.msra.mxu0 0.0
    %1218 = vmatprep.subr.mxu0 0.0
    %1219 = vmatpush2.msra.mxu0 0.0
    %1220 = vmatprep.subr.mxu0 0.0
    %1221 = vmatpush2.msra.mxu0 0.0
    %1222 = vmatprep.subr.mxu0 0.0
    %1223 = vmatpush2.msra.mxu0 0.0
    %1224 = vmatprep.subr.mxu0 0.0
    %1225 = vmatpush2.msra.mxu0 0.0
    %1226 = vmatprep.subr.mxu0 0.0
    %1227 = vmatpush2.msra.mxu0 0.0
    %1228 = vmatprep.subr.mxu0 0.0
    %1229 = vmatpush2.msra.mxu0 0.0
    %1230 = vmatprep.subr.mxu0 0.0
    %1231 = vmatpush2.msra.mxu0 0.0
    %1232 = vmatprep.subr.mxu0 0.0
    %1233 = vmatpush2.msra.mxu0 0.0
    %1234 = vmatprep.subr.mxu0 0.0
    %1235 = vmatpush2.msra.mxu0 0.0
    %1236 = vmatprep.subr.mxu0 0.0
    %1237 = vmatpush2.msra.mxu0 0.0
    %1238 = vmatprep.subr.mxu0 0.0
    %1239 = vmatpush2.msra.mxu0 0.0
    %1240 = vmatprep.mubr.f32.mxu0 0.0
    %1241 = vmatmul.mubr.f32.gmra.mxu0 %v1171
    %v1242 = vpop.f32.mrf.mxu0
    %v1243 = vadd.f32 %v1168, %v1242
    %v1244 = vpop.f32.mrf.mxu0
    %1245 = vmatprep.mubr.f32.mxu0 0.0
    %1246 = vmatmul.mubr.f32.gmra.mxu0 %v1174
    %v1247 = vpop.f32.mrf.mxu0
    %v1248 = vadd.f32 %v1168, %v1247
    %v1249 = vpop.f32.mrf.mxu0
    %1250 = vdwg.mxu0
    %v1251 = vmul.f32 %v1243, 0.5
    %v1252 = vmul.f32 %v1248, 0.5
    %v1253 = vrcp.pop 1.4142135
    %v1254 = vmul.f32 %v1243, %v1253
    %v1255 = vmul.f32 %v1248, %v1253
    %v1256 = verf.f32.pop %v1254
    %v1257 = verf.f32.pop %v1255
    %v1258 = vadd.f32 %v1256, 1.0
    %v1259 = vadd.f32 %v1257, 1.0
    %v1260 = vmul.f32 %v1251, %v1258
    %v1261 = vmul.f32 %v1252, %v1259
    %v1262 = vld [vmem:[%s12] sm:$0xff]
    %v1263 = vld [vmem:[%s12 + $0x8] sm:$0xff]
    %v1264 = vld [vmem:[%s12 + $0x10] sm:$0xff]
    %v1265 = vld [vmem:[%s12 + $0x18] sm:$0xff]
    %v1266 = vld [vmem:[%s12 + $0x20] sm:$0xff]
    %v1267 = vld [vmem:[%s12 + $0x28] sm:$0xff]
    %v1268 = vld [vmem:[%s12 + $0x30] sm:$0xff]
    %v1269 = vld [vmem:[%s12 + $0x38] sm:$0xff]
    %v1270 = vld [vmem:[%s12 + $0x40] sm:$0xff]
    %v1271 = vld [vmem:[%s12 + $0x48] sm:$0xff]
    %v1272 = vld [vmem:[%s12 + $0x50] sm:$0xff]
    %v1273 = vld [vmem:[%s12 + $0x58] sm:$0xff]
    %v1274 = vld [vmem:[%s12 + $0x60] sm:$0xff]
    %v1275 = vld [vmem:[%s12 + $0x68] sm:$0xff]
    %v1276 = vld [vmem:[%s12 + $0x70] sm:$0xff]
    %v1277 = vld [vmem:[%s12 + $0x78] sm:$0xff]
    %v1278 = vld [vmem:[%s13] sm:$0x1]
    %v1280 = vlaneseq
    %v1281 = vshrl.u32 %v1280, 7
    %v1282 = vsub.s32 0, %v1281
    %v1283 = vrot.slane %v1278, %v1282
    %1285 = vmatprep.subr.mxu0 0.0
    %1286 = vmatpush1.msra.mxu0 %v1277
    %1287 = vmatprep.subr.mxu0 0.0
    %1288 = vmatpush1.msra.mxu0 %v1276
    %1289 = vmatprep.subr.mxu0 0.0
    %1290 = vmatpush1.msra.mxu0 %v1275
    %1291 = vmatprep.subr.mxu0 0.0
    %1292 = vmatpush1.msra.mxu0 %v1274
    %1293 = vmatprep.subr.mxu0 0.0
    %1294 = vmatpush1.msra.mxu0 %v1273
    %1295 = vmatprep.subr.mxu0 0.0
    %1296 = vmatpush1.msra.mxu0 %v1272
    %1297 = vmatprep.subr.mxu0 0.0
    %1298 = vmatpush1.msra.mxu0 %v1271
    %1299 = vmatprep.subr.mxu0 0.0
    %1300 = vmatpush1.msra.mxu0 %v1270
    %1301 = vmatprep.subr.mxu0 0.0
    %1302 = vmatpush1.msra.mxu0 %v1269
    %1303 = vmatprep.subr.mxu0 0.0
    %1304 = vmatpush1.msra.mxu0 %v1268
    %1305 = vmatprep.subr.mxu0 0.0
    %1306 = vmatpush1.msra.mxu0 %v1267
    %1307 = vmatprep.subr.mxu0 0.0
    %1308 = vmatpush1.msra.mxu0 %v1266
    %1309 = vmatprep.subr.mxu0 0.0
    %1310 = vmatpush1.msra.mxu0 %v1265
    %1311 = vmatprep.subr.mxu0 0.0
    %1312 = vmatpush1.msra.mxu0 %v1264
    %1313 = vmatprep.subr.mxu0 0.0
    %1314 = vmatpush1.msra.mxu0 %v1263
    %1315 = vmatprep.subr.mxu0 0.0
    %1316 = vmatpush1.msra.mxu0 %v1262
    %1317 = vmatprep.subr.mxu0 0.0
    %1318 = vmatpush2.msra.mxu0 0.0
    %1319 = vmatprep.subr.mxu0 0.0
    %1320 = vmatpush2.msra.mxu0 0.0
    %1321 = vmatprep.subr.mxu0 0.0
    %1322 = vmatpush2.msra.mxu0 0.0
    %1323 = vmatprep.subr.mxu0 0.0
    %1324 = vmatpush2.msra.mxu0 0.0
    %1325 = vmatprep.subr.mxu0 0.0
    %1326 = vmatpush2.msra.mxu0 0.0
    %1327 = vmatprep.subr.mxu0 0.0
    %1328 = vmatpush2.msra.mxu0 0.0
    %1329 = vmatprep.subr.mxu0 0.0
    %1330 = vmatpush2.msra.mxu0 0.0
    %1331 = vmatprep.subr.mxu0 0.0
    %1332 = vmatpush2.msra.mxu0 0.0
    %1333 = vmatprep.subr.mxu0 0.0
    %1334 = vmatpush2.msra.mxu0 0.0
    %1335 = vmatprep.subr.mxu0 0.0
    %1336 = vmatpush2.msra.mxu0 0.0
    %1337 = vmatprep.subr.mxu0 0.0
    %1338 = vmatpush2.msra.mxu0 0.0
    %1339 = vmatprep.subr.mxu0 0.0
    %1340 = vmatpush2.msra.mxu0 0.0
    %1341 = vmatprep.subr.mxu0 0.0
    %1342 = vmatpush2.msra.mxu0 0.0
    %1343 = vmatprep.subr.mxu0 0.0
    %1344 = vmatpush2.msra.mxu0 0.0
    %1345 = vmatprep.subr.mxu0 0.0
    %1346 = vmatpush2.msra.mxu0 0.0
    %1347 = vmatprep.subr.mxu0 0.0
    %1348 = vmatpush2.msra.mxu0 0.0
    %1349 = vmatprep.mubr.f32.mxu0 0.0
    %1350 = vmatmul.mubr.f32.gmra.mxu0 %v1260
    %v1351 = vpop.f32.mrf.mxu0
    %v1352 = vadd.f32 %v1283, %v1351
    %v1353 = vpop.f32.mrf.mxu0
    %1354 = vmatprep.mubr.f32.mxu0 0.0
    %1355 = vmatmul.mubr.f32.gmra.mxu0 %v1261
    %v1356 = vpop.f32.mrf.mxu0
    %v1357 = vadd.f32 %v1283, %v1356
    %v1358 = vpop.f32.mrf.mxu0
    %1359 = vdwg.mxu0
    %v1360 = vadd.f32 %v1113, %v1352
    %v1361 = vadd.f32 %v1114, %v1357
    %1362 = vst.msk [vmem:[#allocation2] sm:$0xff] %vm50, %v1360
    %1363 = vst.msk [vmem:[#allocation2 + $0x8] sm:$0xff] %vm50, %v1361
    // Predicated region
    $region58: #{tpu_custom_call.1} parent=1 // pred_check
      _
    $region59: #{tpu_custom_call.1} parent=1 // pred_check_branch
      %1365 = sbr.rel (0) target = $region61
    $region60: #{tpu_custom_call.1} parent=1 // pred_region
      %s1367 = ssub.s32 256, 256
      %1368 = vsyncadd [#allocation3], %s1367
      %s1369 = sshll.u32 [#allocation2], 4
      %s1370 = int_to_ptr.vmem [resolvable:$true] %s1369
      %1375 = dma.vmem_to_hbm [thread:$0]  %s1370, 256, %s14, [#allocation3], 128, 128, 8
    $region61: #{tpu_custom_call.1} parent=1 // pred_fallthru
      _
    // Predicated region
    $region62: #{tpu_custom_call.1} parent=1 // pred_check
      _
    $region63: #{tpu_custom_call.1} parent=1 // pred_check_branch
      %1377 = sbr.rel (0) target = $region65
    $region64: #{tpu_custom_call.1} parent=1 // pred_region
      %1378 = dma.done [#allocation3], 256
    $region65: #{tpu_custom_call.1} parent=1 // pred_fallthru
      _
    %1379 = vsyncpa [#allocation3], 1

</llo_original>
